<compile_context>
chip_gen: v7x
topology: tpu7x:2x2x1
jax: 0.10.0
libtpu: 0.0.40
codegen_flags: <defaults>
</compile_context>

<pallas_src>
import functools

import jax
import jax.numpy as jnp
from jax import lax
from jax.experimental import pallas as pl
from jax.experimental.pallas import tpu as pltpu

NUM_FEATURES = 14
NHID = 128
RATIO = 0.8
F_PAD = 128          # pad layer-1 feature dim 14 -> 128 (lane width)
SUBLANE = 8          # pad node count up to a multiple of 8 (sublane width)

# Optional v6e/v7x throughput path: feed bf16 operands to the MXU for the feature matmuls
# (f32 accumulation).  Default False to keep exact f32 parity with the PyTorch module; the
# score / mask / count math stays f32 either way (v5e has no bf16 VPU/EUP path).
USE_BF16_MXU = False

_VMEM = pl.BlockSpec(memory_space=pltpu.MemorySpace.VMEM)


def _mm_f32(a, b):
    return jnp.dot(a, b, preferred_element_type=jnp.float32)


def _mm_mxu(a, b):
    if USE_BF16_MXU:
        a = a.astype(jnp.bfloat16)
        b = b.astype(jnp.bfloat16)
    return jnp.dot(a, b, preferred_element_type=jnp.float32)


# ----------------------------- fused forward kernel -----------------------------
def _fused_kernel(x_ref, at_ref, bh_ref, bht_ref,
                  w1_ref, b1_ref, p1_ref, w2_ref, b2_ref, p2_ref,
                  o_ref, *, ratio, num_graphs):
    x = x_ref[...]                       # (Np, Fp)  zero-padded node features
    a_t = at_ref[...]                    # (Np, Np)  transposed adjacency A_T[dst, src]
    bh = bh_ref[...]                     # (Np, G)   one-hot graph membership (pad rows = 0)
    bh_t = bht_ref[...]                  # (G, Np)
    np_ = x.shape[0]
    h = w1_ref.shape[1]

    # initial node mask (1 = real node, 0 = padding)
    m0 = jnp.sum(bh, axis=1, keepdims=True)                                   # (Np, 1)

    # shared helpers for the TopK ranking (same-graph indicator, index iotas)
    same = _mm_f32(bh, bh_t)                                                  # (Np, Np)
    row_i = lax.broadcasted_iota(jnp.int32, (np_, np_), 0)
    col_j = lax.broadcasted_iota(jnp.int32, (np_, np_), 1)

    def graph_conv_relu(xin, m, w_cat_ref, b_ref):
        # aggr = m * (A_T @ (x * m))   (mask the small (Np,F) operands, not the (Np,Np) matrix)
        aggr = m * _mm_mxu(a_t, xin * m)                                      # (Np, F)
        h_in = jnp.concatenate([xin, aggr], axis=1)                           # (Np, 2F)
        out = _mm_mxu(h_in, w_cat_ref[...]) + b_ref[...]                      # (Np, H)
        return jnp.maximum(out, 0.0)

    def topk_pool(xin, m, p_ref):
        # p is pre-normalized in the wrapper: p / max(||p||, eps)
        score = jnp.tanh(_mm_f32(xin, p_ref[...]))                            # (Np, 1)
        n_g = _mm_f32(bh_t, m)                                                # (G, 1)
        k_g = jnp.ceil(ratio * n_g)                                           # (G, 1)
        k_i = _mm_f32(bh, k_g)                                                # (Np, 1)
        s_i = score
        s_j = jnp.transpose(score)                                            # (1, Np)
        # rank of node i inside its graph among alive nodes (descending score, ties -> lower idx)
        better = jnp.where((s_j > s_i) | ((s_j == s_i) & (col_j < row_i)), 1.0, 0.0)
        alive_j = jnp.transpose(m)                                            # (1, Np)
        rank = jnp.sum(same * alive_j * better, axis=1, keepdims=True)        # (Np, 1)
        keep = jnp.where((rank < k_i) & (m > 0.0), 1.0, 0.0)                  # (Np, 1)
        return xin * score * keep, keep

    def global_pool(xin, m):
        xm = xin * m
        sums = _mm_f32(bh_t, xm)                                              # (G, H)
        cnts = _mm_f32(bh_t, m)                                               # (G, 1)
        means = sums / jnp.maximum(cnts, 1.0)
        sel = bh * m                                                          # (Np, G)
        neg = jnp.float32(-3.0e38)
        max_rows = []
        for g in range(num_graphs):                                           # G tiny & static
            masked = jnp.where(sel[:, g:g + 1] > 0.0, xin, neg)
            max_rows.append(jnp.max(masked, axis=0, keepdims=True))           # (1, H)
        maxs = jnp.concatenate(max_rows, axis=0)                              # (G, H)
        return means, maxs

    # ---- layer 1 ----
    h1 = graph_conv_relu(x, m0, w1_ref, b1_ref)
    xg1, m1 = topk_pool(h1, m0, p1_ref)
    mean1, max1 = global_pool(xg1, m1)

    # ---- layer 2 ----
    h2 = graph_conv_relu(xg1, m1, w2_ref, b2_ref)
    xg2, m2 = topk_pool(h2, m1, p2_ref)
    mean2, max2 = global_pool(xg2, m2)

    # x1 + x2 written directly into the lane-dense (G, 2H) output (128-lane aligned slices)
    o_ref[:, :h] = mean1 + mean2
    o_ref[:, h:] = max1 + max2


# ------------------------------ wrapper / full forward ---------------------------
def feature_extractor(x, edge_index, batch, params, *, num_graphs):
    n, f = x.shape
    n_pad = ((n + SUBLANE - 1) // SUBLANE) * SUBLANE

    # zero-padded node features: (Np, F_PAD)
    x_p = jnp.zeros((n_pad, F_PAD), jnp.float32).at[:n, :f].set(x.astype(jnp.float32))

    # transposed dense adjacency A_T[dst, src]; pad rows/cols stay zero
    a_t = jnp.zeros((n_pad, n_pad), jnp.float32).at[edge_index[1], edge_index[0]].set(1.0)

    # one-hot batch membership (padded nodes belong to no graph) + its transpose
    bh = (batch[:, None] == jnp.arange(num_graphs, dtype=batch.dtype)[None, :]).astype(jnp.float32)
    bh = jnp.zeros((n_pad, num_graphs), jnp.float32).at[:n, :].set(bh)
    bh_t = jnp.transpose(bh)                                                  # (G, Np)

    # concatenated GraphConv weights [W_root ; W_rel], feature dim zero-padded to F_PAD
    w1_root = jnp.zeros((F_PAD, NHID), jnp.float32).at[:f, :].set(params["w1_root"])
    w1_rel = jnp.zeros((F_PAD, NHID), jnp.float32).at[:f, :].set(params["w1_rel"])
    w1 = jnp.concatenate([w1_root, w1_rel], axis=0)                           # (2*F_PAD, NHID)
    w2 = jnp.concatenate([params["w2_root"], params["w2_rel"]], axis=0)       # (2*NHID, NHID)

    # pre-normalized TopK scoring vectors (eps guard against zero norm)
    p1 = params["p1"] / jnp.maximum(jnp.sqrt(jnp.sum(params["p1"] ** 2)), 1e-12)
    p2 = params["p2"] / jnp.maximum(jnp.sqrt(jnp.sum(params["p2"] ** 2)), 1e-12)

    kernel = functools.partial(_fused_kernel, ratio=RATIO, num_graphs=num_graphs)
    return pl.pallas_call(
        kernel,
        out_shape=jax.ShapeDtypeStruct((num_graphs, 2 * NHID), jnp.float32),
        in_specs=[_VMEM] * 10,
        out_specs=_VMEM,
    )(x_p, a_t, bh, bh_t, w1, params["b1"], p1, w2, params["b2"], p2)


def init_params(key):
    ks = jax.random.split(key, 8)
    s1 = 1.0 / jnp.sqrt(jnp.float32(NUM_FEATURES))
    s2 = 1.0 / jnp.sqrt(jnp.float32(NHID))
    return {
        "w1_root": jax.random.normal(ks[0], (NUM_FEATURES, NHID), jnp.float32) * s1,
        "w1_rel":  jax.random.normal(ks[1], (NUM_FEATURES, NHID), jnp.float32) * s1,
        "b1":      jax.random.normal(ks[2], (1, NHID), jnp.float32) * s1,
        "p1":      jax.random.normal(ks[3], (NHID, 1), jnp.float32) * s2,
        "w2_root": jax.random.normal(ks[4], (NHID, NHID), jnp.float32) * s2,
        "w2_rel":  jax.random.normal(ks[5], (NHID, NHID), jnp.float32) * s2,
        "b2":      jax.random.normal(ks[6], (1, NHID), jnp.float32) * s2,
        "p2":      jax.random.normal(ks[7], (NHID, 1), jnp.float32) * s2,
    }


if __name__ == "__main__":
    key = jax.random.PRNGKey(0)
    k_x, k_p = jax.random.split(key)

    # small deterministic graph: 2 graphs x 6 nodes each, ring topology (both directions)
    num_graphs = 2
    nodes_per_graph = 6
    n = num_graphs * nodes_per_graph

    src, dst = [], []
    for g in range(num_graphs):
        off = g * nodes_per_graph
        for i in range(nodes_per_graph):
            u, v = off + i, off + (i + 1) % nodes_per_graph
            src += [u, v]
            dst += [v, u]
    edge_index = jnp.array([src, dst], dtype=jnp.int32)          # (2, 24)
    batch = jnp.array([g for g in range(num_graphs) for _ in range(nodes_per_graph)],
                      dtype=jnp.int32)                           # (12,)
    x = jax.random.normal(k_x, (n, NUM_FEATURES), jnp.float32)   # (12, 14)

    params = init_params(k_p)

    fwd = jax.jit(functools.partial(feature_extractor, num_graphs=num_graphs))
    out = fwd(x, edge_index, batch, params)
    jax.block_until_ready(out)
    assert out.shape == (num_graphs, 2 * NHID)
    assert bool(jnp.all(jnp.isfinite(out)))
    print("KERNEL_OK")
</pallas_src>

<mosaic_0001>
module attributes {stable_mosaic.version = 11 : i64} {
  func.func @_fused_kernel(%arg0: memref<16x128xf32, #tpu.memory_space<vmem>>, %arg1: memref<16x16xf32, #tpu.memory_space<vmem>>, %arg2: memref<16x2xf32, #tpu.memory_space<vmem>>, %arg3: memref<2x16xf32, #tpu.memory_space<vmem>>, %arg4: memref<256x128xf32, #tpu.memory_space<vmem>>, %arg5: memref<1x128xf32, #tpu.memory_space<vmem>>, %arg6: memref<128x1xf32, #tpu.memory_space<vmem>>, %arg7: memref<256x128xf32, #tpu.memory_space<vmem>>, %arg8: memref<1x128xf32, #tpu.memory_space<vmem>>, %arg9: memref<128x1xf32, #tpu.memory_space<vmem>>, %arg10: memref<2x256xf32, #tpu.memory_space<vmem>>) attributes {dimension_semantics = [], scalar_prefetch = 0 : i64, scratch_operands = 0 : i64, tpu.core_type = #tpu.core_type<tc>} {
    %c0 = arith.constant 0 : index
    %c0_0 = arith.constant 0 : index
    %0 = vector.load %arg0[%c0, %c0_0] : memref<16x128xf32, #tpu.memory_space<vmem>>, vector<16x128xf32>
    %c0_1 = arith.constant 0 : index
    %c0_2 = arith.constant 0 : index
    %1 = vector.load %arg1[%c0_1, %c0_2] : memref<16x16xf32, #tpu.memory_space<vmem>>, vector<16x16xf32>
    %c0_3 = arith.constant 0 : index
    %c0_4 = arith.constant 0 : index
    %2 = vector.load %arg2[%c0_3, %c0_4] : memref<16x2xf32, #tpu.memory_space<vmem>>, vector<16x2xf32>
    %c0_5 = arith.constant 0 : index
    %c0_6 = arith.constant 0 : index
    %3 = vector.load %arg3[%c0_5, %c0_6] : memref<2x16xf32, #tpu.memory_space<vmem>>, vector<2x16xf32>
    %cst = arith.constant dense<0.000000e+00> : vector<16xf32>
    %4 = vector.multi_reduction <add>, %2, %cst [1] : vector<16x2xf32> to vector<16xf32>
    %5 = vector.shape_cast %4 : vector<16xf32> to vector<16x1xf32>
    %cst_7 = arith.constant dense<0.000000e+00> : vector<16x16xf32>
    %6 = tpu.matmul %2, %3, %cst_7 {dimension_numbers = #tpu.dot_dimension_numbers<[1], [0], [0], [1], [0, 0, 1, 1], [], []>} : vector<16x2xf32>, vector<2x16xf32>, vector<16x16xf32> -> vector<16x16xf32>
    %7 = tpu.iota {dimensions = array<i32: 0>} : vector<16x16xi32>
    %8 = tpu.iota {dimensions = array<i32: 1>} : vector<16x16xi32>
    %9 = vector.broadcast %5 : vector<16x1xf32> to vector<16x128xf32>
    %10 = arith.mulf %0, %9 : vector<16x128xf32>
    %cst_8 = arith.constant dense<0.000000e+00> : vector<16x128xf32>
    %11 = tpu.matmul %1, %10, %cst_8 {dimension_numbers = #tpu.dot_dimension_numbers<[1], [0], [0], [1], [0, 0, 1, 1], [], []>} : vector<16x16xf32>, vector<16x128xf32>, vector<16x128xf32> -> vector<16x128xf32>
    %12 = vector.broadcast %5 : vector<16x1xf32> to vector<16x128xf32>
    %13 = arith.mulf %12, %11 : vector<16x128xf32>
    %14 = tpu.concatenate %0, %13 in 1 : vector<16x128xf32>, vector<16x128xf32> -> vector<16x256xf32>
    %c0_9 = arith.constant 0 : index
    %c0_10 = arith.constant 0 : index
    %15 = vector.load %arg4[%c0_9, %c0_10] : memref<256x128xf32, #tpu.memory_space<vmem>>, vector<256x128xf32>
    %cst_11 = arith.constant dense<0.000000e+00> : vector<16x128xf32>
    %16 = tpu.matmul %14, %15, %cst_11 {dimension_numbers = #tpu.dot_dimension_numbers<[1], [0], [0], [1], [0, 0, 1, 1], [], []>} : vector<16x256xf32>, vector<256x128xf32>, vector<16x128xf32> -> vector<16x128xf32>
    %c0_12 = arith.constant 0 : index
    %c0_13 = arith.constant 0 : index
    %17 = vector.load %arg5[%c0_12, %c0_13] : memref<1x128xf32, #tpu.memory_space<vmem>>, vector<1x128xf32>
    %18 = vector.broadcast %17 : vector<1x128xf32> to vector<16x128xf32>
    %19 = arith.addf %16, %18 : vector<16x128xf32>
    %cst_14 = arith.constant 0.000000e+00 : f32
    %20 = vector.broadcast %cst_14 : f32 to vector<16x128xf32>
    %21 = arith.maximumf %19, %20 : vector<16x128xf32>
    %c0_15 = arith.constant 0 : index
    %c0_16 = arith.constant 0 : index
    %22 = vector.load %arg6[%c0_15, %c0_16] : memref<128x1xf32, #tpu.memory_space<vmem>>, vector<128x1xf32>
    %cst_17 = arith.constant dense<0.000000e+00> : vector<16x1xf32>
    %23 = tpu.matmul %21, %22, %cst_17 {dimension_numbers = #tpu.dot_dimension_numbers<[1], [0], [0], [1], [0, 0, 1, 1], [], []>} : vector<16x128xf32>, vector<128x1xf32>, vector<16x1xf32> -> vector<16x1xf32>
    %24 = math.tanh %23 : vector<16x1xf32>
    %cst_18 = arith.constant dense<0.000000e+00> : vector<2x1xf32>
    %25 = tpu.matmul %3, %5, %cst_18 {dimension_numbers = #tpu.dot_dimension_numbers<[1], [0], [0], [1], [0, 0, 1, 1], [], []>} : vector<2x16xf32>, vector<16x1xf32>, vector<2x1xf32> -> vector<2x1xf32>
    %cst_19 = arith.constant 8.000000e-01 : f32
    %26 = vector.broadcast %cst_19 : f32 to vector<2x1xf32>
    %27 = arith.mulf %26, %25 : vector<2x1xf32>
    %28 = math.ceil %27 : vector<2x1xf32>
    %cst_20 = arith.constant dense<0.000000e+00> : vector<16x1xf32>
    %29 = tpu.matmul %2, %28, %cst_20 {dimension_numbers = #tpu.dot_dimension_numbers<[1], [0], [0], [1], [0, 0, 1, 1], [], []>} : vector<16x2xf32>, vector<2x1xf32>, vector<16x1xf32> -> vector<16x1xf32>
    %30 = tpu.transpose %24, [1, 0] : vector<16x1xf32> -> vector<1x16xf32>
    %31 = vector.broadcast %30 : vector<1x16xf32> to vector<16x16xf32>
    %32 = vector.broadcast %24 : vector<16x1xf32> to vector<16x16xf32>
    %33 = arith.cmpf ogt, %31, %32 : vector<16x16xf32>
    %34 = vector.broadcast %30 : vector<1x16xf32> to vector<16x16xf32>
    %35 = vector.broadcast %24 : vector<16x1xf32> to vector<16x16xf32>
    %36 = arith.cmpf oeq, %34, %35 : vector<16x16xf32>
    %37 = arith.cmpi slt, %8, %7 : vector<16x16xi32>
    %38 = arith.andi %36, %37 : vector<16x16xi1>
    %39 = arith.ori %33, %38 : vector<16x16xi1>
    %cst_21 = arith.constant 1.000000e+00 : f32
    %cst_22 = arith.constant 0.000000e+00 : f32
    %40 = vector.broadcast %cst_21 : f32 to vector<16x16xf32>
    %41 = vector.broadcast %cst_22 : f32 to vector<16x16xf32>
    %42 = arith.select %39, %40, %41 : vector<16x16xi1>, vector<16x16xf32>
    %43 = tpu.transpose %5, [1, 0] : vector<16x1xf32> -> vector<1x16xf32>
    %44 = vector.broadcast %43 : vector<1x16xf32> to vector<16x16xf32>
    %45 = arith.mulf %6, %44 : vector<16x16xf32>
    %46 = arith.mulf %45, %42 : vector<16x16xf32>
    %cst_23 = arith.constant dense<0.000000e+00> : vector<16xf32>
    %47 = vector.multi_reduction <add>, %46, %cst_23 [1] : vector<16x16xf32> to vector<16xf32>
    %48 = vector.shape_cast %47 : vector<16xf32> to vector<16x1xf32>
    %49 = arith.cmpf olt, %48, %29 : vector<16x1xf32>
    %cst_24 = arith.constant 0.000000e+00 : f32
    %50 = vector.broadcast %cst_24 : f32 to vector<16x1xf32>
    %51 = arith.cmpf ogt, %5, %50 : vector<16x1xf32>
    %52 = arith.andi %49, %51 : vector<16x1xi1>
    %cst_25 = arith.constant 1.000000e+00 : f32
    %cst_26 = arith.constant 0.000000e+00 : f32
    %53 = vector.broadcast %cst_25 : f32 to vector<16x1xf32>
    %54 = vector.broadcast %cst_26 : f32 to vector<16x1xf32>
    %55 = arith.select %52, %53, %54 : vector<16x1xi1>, vector<16x1xf32>
    %56 = vector.broadcast %24 : vector<16x1xf32> to vector<16x128xf32>
    %57 = arith.mulf %21, %56 : vector<16x128xf32>
    %58 = vector.broadcast %55 : vector<16x1xf32> to vector<16x128xf32>
    %59 = arith.mulf %57, %58 : vector<16x128xf32>
    %60 = vector.broadcast %55 : vector<16x1xf32> to vector<16x128xf32>
    %61 = arith.mulf %59, %60 : vector<16x128xf32>
    %cst_27 = arith.constant dense<0.000000e+00> : vector<2x128xf32>
    %62 = tpu.matmul %3, %61, %cst_27 {dimension_numbers = #tpu.dot_dimension_numbers<[1], [0], [0], [1], [0, 0, 1, 1], [], []>} : vector<2x16xf32>, vector<16x128xf32>, vector<2x128xf32> -> vector<2x128xf32>
    %cst_28 = arith.constant dense<0.000000e+00> : vector<2x1xf32>
    %63 = tpu.matmul %3, %55, %cst_28 {dimension_numbers = #tpu.dot_dimension_numbers<[1], [0], [0], [1], [0, 0, 1, 1], [], []>} : vector<2x16xf32>, vector<16x1xf32>, vector<2x1xf32> -> vector<2x1xf32>
    %cst_29 = arith.constant 1.000000e+00 : f32
    %64 = vector.broadcast %cst_29 : f32 to vector<2x1xf32>
    %65 = arith.maximumf %63, %64 : vector<2x1xf32>
    %66 = vector.broadcast %65 : vector<2x1xf32> to vector<2x128xf32>
    %67 = arith.divf %62, %66 : vector<2x128xf32>
    %68 = vector.broadcast %55 : vector<16x1xf32> to vector<16x2xf32>
    %69 = arith.mulf %2, %68 : vector<16x2xf32>
    %70 = vector.extract_strided_slice %69 {offsets = [0, 0], sizes = [16, 1], strides = [1, 1]} : vector<16x2xf32> to vector<16x1xf32>
    %cst_30 = arith.constant 0.000000e+00 : f32
    %71 = vector.broadcast %cst_30 : f32 to vector<16x1xf32>
    %72 = arith.cmpf ogt, %70, %71 : vector<16x1xf32>
    %cst_31 = arith.constant -3.000000e+38 : f32
    %73 = vector.shape_cast %72 : vector<16x1xi1> to vector<16x1xi1>
    %74 = vector.broadcast %73 : vector<16x1xi1> to vector<16x128xi1>
    %75 = vector.broadcast %cst_31 : f32 to vector<16x128xf32>
    %76 = arith.select %74, %59, %75 : vector<16x128xi1>, vector<16x128xf32>
    %cst_32 = arith.constant dense<0xFF800000> : vector<128xf32>
    %77 = vector.multi_reduction <maximumf>, %76, %cst_32 [0] : vector<16x128xf32> to vector<128xf32>
    %78 = vector.shape_cast %77 : vector<128xf32> to vector<1x128xf32>
    %79 = vector.extract_strided_slice %69 {offsets = [0, 1], sizes = [16, 1], strides = [1, 1]} : vector<16x2xf32> to vector<16x1xf32>
    %cst_33 = arith.constant 0.000000e+00 : f32
    %80 = vector.broadcast %cst_33 : f32 to vector<16x1xf32>
    %81 = arith.cmpf ogt, %79, %80 : vector<16x1xf32>
    %cst_34 = arith.constant -3.000000e+38 : f32
    %82 = vector.shape_cast %81 : vector<16x1xi1> to vector<16x1xi1>
    %83 = vector.broadcast %82 : vector<16x1xi1> to vector<16x128xi1>
    %84 = vector.broadcast %cst_34 : f32 to vector<16x128xf32>
    %85 = arith.select %83, %59, %84 : vector<16x128xi1>, vector<16x128xf32>
    %cst_35 = arith.constant dense<0xFF800000> : vector<128xf32>
    %86 = vector.multi_reduction <maximumf>, %85, %cst_35 [0] : vector<16x128xf32> to vector<128xf32>
    %87 = vector.shape_cast %86 : vector<128xf32> to vector<1x128xf32>
    %88 = tpu.concatenate %78, %87 in 0 : vector<1x128xf32>, vector<1x128xf32> -> vector<2x128xf32>
    %89 = vector.broadcast %55 : vector<16x1xf32> to vector<16x128xf32>
    %90 = arith.mulf %59, %89 : vector<16x128xf32>
    %cst_36 = arith.constant dense<0.000000e+00> : vector<16x128xf32>
    %91 = tpu.matmul %1, %90, %cst_36 {dimension_numbers = #tpu.dot_dimension_numbers<[1], [0], [0], [1], [0, 0, 1, 1], [], []>} : vector<16x16xf32>, vector<16x128xf32>, vector<16x128xf32> -> vector<16x128xf32>
    %92 = vector.broadcast %55 : vector<16x1xf32> to vector<16x128xf32>
    %93 = arith.mulf %92, %91 : vector<16x128xf32>
    %94 = tpu.concatenate %59, %93 in 1 : vector<16x128xf32>, vector<16x128xf32> -> vector<16x256xf32>
    %c0_37 = arith.constant 0 : index
    %c0_38 = arith.constant 0 : index
    %95 = vector.load %arg7[%c0_37, %c0_38] : memref<256x128xf32, #tpu.memory_space<vmem>>, vector<256x128xf32>
    %cst_39 = arith.constant dense<0.000000e+00> : vector<16x128xf32>
    %96 = tpu.matmul %94, %95, %cst_39 {dimension_numbers = #tpu.dot_dimension_numbers<[1], [0], [0], [1], [0, 0, 1, 1], [], []>} : vector<16x256xf32>, vector<256x128xf32>, vector<16x128xf32> -> vector<16x128xf32>
    %c0_40 = arith.constant 0 : index
    %c0_41 = arith.constant 0 : index
    %97 = vector.load %arg8[%c0_40, %c0_41] : memref<1x128xf32, #tpu.memory_space<vmem>>, vector<1x128xf32>
    %98 = vector.broadcast %97 : vector<1x128xf32> to vector<16x128xf32>
    %99 = arith.addf %96, %98 : vector<16x128xf32>
    %cst_42 = arith.constant 0.000000e+00 : f32
    %100 = vector.broadcast %cst_42 : f32 to vector<16x128xf32>
    %101 = arith.maximumf %99, %100 : vector<16x128xf32>
    %c0_43 = arith.constant 0 : index
    %c0_44 = arith.constant 0 : index
    %102 = vector.load %arg9[%c0_43, %c0_44] : memref<128x1xf32, #tpu.memory_space<vmem>>, vector<128x1xf32>
    %cst_45 = arith.constant dense<0.000000e+00> : vector<16x1xf32>
    %103 = tpu.matmul %101, %102, %cst_45 {dimension_numbers = #tpu.dot_dimension_numbers<[1], [0], [0], [1], [0, 0, 1, 1], [], []>} : vector<16x128xf32>, vector<128x1xf32>, vector<16x1xf32> -> vector<16x1xf32>
    %104 = math.tanh %103 : vector<16x1xf32>
    %cst_46 = arith.constant dense<0.000000e+00> : vector<2x1xf32>
    %105 = tpu.matmul %3, %55, %cst_46 {dimension_numbers = #tpu.dot_dimension_numbers<[1], [0], [0], [1], [0, 0, 1, 1], [], []>} : vector<2x16xf32>, vector<16x1xf32>, vector<2x1xf32> -> vector<2x1xf32>
    %cst_47 = arith.constant 8.000000e-01 : f32
    %106 = vector.broadcast %cst_47 : f32 to vector<2x1xf32>
    %107 = arith.mulf %106, %105 : vector<2x1xf32>
    %108 = math.ceil %107 : vector<2x1xf32>
    %cst_48 = arith.constant dense<0.000000e+00> : vector<16x1xf32>
    %109 = tpu.matmul %2, %108, %cst_48 {dimension_numbers = #tpu.dot_dimension_numbers<[1], [0], [0], [1], [0, 0, 1, 1], [], []>} : vector<16x2xf32>, vector<2x1xf32>, vector<16x1xf32> -> vector<16x1xf32>
    %110 = tpu.transpose %104, [1, 0] : vector<16x1xf32> -> vector<1x16xf32>
    %111 = vector.broadcast %110 : vector<1x16xf32> to vector<16x16xf32>
    %112 = vector.broadcast %104 : vector<16x1xf32> to vector<16x16xf32>
    %113 = arith.cmpf ogt, %111, %112 : vector<16x16xf32>
    %114 = vector.broadcast %110 : vector<1x16xf32> to vector<16x16xf32>
    %115 = vector.broadcast %104 : vector<16x1xf32> to vector<16x16xf32>
    %116 = arith.cmpf oeq, %114, %115 : vector<16x16xf32>
    %117 = arith.cmpi slt, %8, %7 : vector<16x16xi32>
    %118 = arith.andi %116, %117 : vector<16x16xi1>
    %119 = arith.ori %113, %118 : vector<16x16xi1>
    %cst_49 = arith.constant 1.000000e+00 : f32
    %cst_50 = arith.constant 0.000000e+00 : f32
    %120 = vector.broadcast %cst_49 : f32 to vector<16x16xf32>
    %121 = vector.broadcast %cst_50 : f32 to vector<16x16xf32>
    %122 = arith.select %119, %120, %121 : vector<16x16xi1>, vector<16x16xf32>
    %123 = tpu.transpose %55, [1, 0] : vector<16x1xf32> -> vector<1x16xf32>
    %124 = vector.broadcast %123 : vector<1x16xf32> to vector<16x16xf32>
    %125 = arith.mulf %6, %124 : vector<16x16xf32>
    %126 = arith.mulf %125, %122 : vector<16x16xf32>
    %cst_51 = arith.constant dense<0.000000e+00> : vector<16xf32>
    %127 = vector.multi_reduction <add>, %126, %cst_51 [1] : vector<16x16xf32> to vector<16xf32>
    %128 = vector.shape_cast %127 : vector<16xf32> to vector<16x1xf32>
    %129 = arith.cmpf olt, %128, %109 : vector<16x1xf32>
    %cst_52 = arith.constant 0.000000e+00 : f32
    %130 = vector.broadcast %cst_52 : f32 to vector<16x1xf32>
    %131 = arith.cmpf ogt, %55, %130 : vector<16x1xf32>
    %132 = arith.andi %129, %131 : vector<16x1xi1>
    %cst_53 = arith.constant 1.000000e+00 : f32
    %cst_54 = arith.constant 0.000000e+00 : f32
    %133 = vector.broadcast %cst_53 : f32 to vector<16x1xf32>
    %134 = vector.broadcast %cst_54 : f32 to vector<16x1xf32>
    %135 = arith.select %132, %133, %134 : vector<16x1xi1>, vector<16x1xf32>
    %136 = vector.broadcast %104 : vector<16x1xf32> to vector<16x128xf32>
    %137 = arith.mulf %101, %136 : vector<16x128xf32>
    %138 = vector.broadcast %135 : vector<16x1xf32> to vector<16x128xf32>
    %139 = arith.mulf %137, %138 : vector<16x128xf32>
    %140 = vector.broadcast %135 : vector<16x1xf32> to vector<16x128xf32>
    %141 = arith.mulf %139, %140 : vector<16x128xf32>
    %cst_55 = arith.constant dense<0.000000e+00> : vector<2x128xf32>
    %142 = tpu.matmul %3, %141, %cst_55 {dimension_numbers = #tpu.dot_dimension_numbers<[1], [0], [0], [1], [0, 0, 1, 1], [], []>} : vector<2x16xf32>, vector<16x128xf32>, vector<2x128xf32> -> vector<2x128xf32>
    %cst_56 = arith.constant dense<0.000000e+00> : vector<2x1xf32>
    %143 = tpu.matmul %3, %135, %cst_56 {dimension_numbers = #tpu.dot_dimension_numbers<[1], [0], [0], [1], [0, 0, 1, 1], [], []>} : vector<2x16xf32>, vector<16x1xf32>, vector<2x1xf32> -> vector<2x1xf32>
    %cst_57 = arith.constant 1.000000e+00 : f32
    %144 = vector.broadcast %cst_57 : f32 to vector<2x1xf32>
    %145 = arith.maximumf %143, %144 : vector<2x1xf32>
    %146 = vector.broadcast %145 : vector<2x1xf32> to vector<2x128xf32>
    %147 = arith.divf %142, %146 : vector<2x128xf32>
    %148 = vector.broadcast %135 : vector<16x1xf32> to vector<16x2xf32>
    %149 = arith.mulf %2, %148 : vector<16x2xf32>
    %150 = vector.extract_strided_slice %149 {offsets = [0, 0], sizes = [16, 1], strides = [1, 1]} : vector<16x2xf32> to vector<16x1xf32>
    %cst_58 = arith.constant 0.000000e+00 : f32
    %151 = vector.broadcast %cst_58 : f32 to vector<16x1xf32>
    %152 = arith.cmpf ogt, %150, %151 : vector<16x1xf32>
    %cst_59 = arith.constant -3.000000e+38 : f32
    %153 = vector.shape_cast %152 : vector<16x1xi1> to vector<16x1xi1>
    %154 = vector.broadcast %153 : vector<16x1xi1> to vector<16x128xi1>
    %155 = vector.broadcast %cst_59 : f32 to vector<16x128xf32>
    %156 = arith.select %154, %139, %155 : vector<16x128xi1>, vector<16x128xf32>
    %cst_60 = arith.constant dense<0xFF800000> : vector<128xf32>
    %157 = vector.multi_reduction <maximumf>, %156, %cst_60 [0] : vector<16x128xf32> to vector<128xf32>
    %158 = vector.shape_cast %157 : vector<128xf32> to vector<1x128xf32>
    %159 = vector.extract_strided_slice %149 {offsets = [0, 1], sizes = [16, 1], strides = [1, 1]} : vector<16x2xf32> to vector<16x1xf32>
    %cst_61 = arith.constant 0.000000e+00 : f32
    %160 = vector.broadcast %cst_61 : f32 to vector<16x1xf32>
    %161 = arith.cmpf ogt, %159, %160 : vector<16x1xf32>
    %cst_62 = arith.constant -3.000000e+38 : f32
    %162 = vector.shape_cast %161 : vector<16x1xi1> to vector<16x1xi1>
    %163 = vector.broadcast %162 : vector<16x1xi1> to vector<16x128xi1>
    %164 = vector.broadcast %cst_62 : f32 to vector<16x128xf32>
    %165 = arith.select %163, %139, %164 : vector<16x128xi1>, vector<16x128xf32>
    %cst_63 = arith.constant dense<0xFF800000> : vector<128xf32>
    %166 = vector.multi_reduction <maximumf>, %165, %cst_63 [0] : vector<16x128xf32> to vector<128xf32>
    %167 = vector.shape_cast %166 : vector<128xf32> to vector<1x128xf32>
    %168 = tpu.concatenate %158, %167 in 0 : vector<1x128xf32>, vector<1x128xf32> -> vector<2x128xf32>
    %169 = arith.addf %67, %147 : vector<2x128xf32>
    %c0_64 = arith.constant 0 : index
    %c0_65 = arith.constant 0 : index
    %170 = vector.load %arg10[%c0_64, %c0_65] : memref<2x256xf32, #tpu.memory_space<vmem>>, vector<2x128xf32>
    tpu.vector_store %arg10[%c0_64, %c0_65], %169 {strides = array<i32>} : memref<2x256xf32, #tpu.memory_space<vmem>>, vector<2x128xf32>,
    %171 = arith.addf %88, %168 : vector<2x128xf32>
    %c0_66 = arith.constant 0 : index
    %c128 = arith.constant 128 : index
    %172 = vector.load %arg10[%c0_66, %c128] : memref<2x256xf32, #tpu.memory_space<vmem>>, vector<2x128xf32>
    tpu.vector_store %arg10[%c0_66, %c128], %171 {strides = array<i32>} : memref<2x256xf32, #tpu.memory_space<vmem>>, vector<2x128xf32>,
    return
  }
}

</mosaic_0001>

<llo_original>
// kernel: feature_extractor.1
$region0: #{feature_extractor.1}
  #allocation0 [shape = 'u32[]', space=smem, size = 0x4, offset = 0x4, fixed_abs, tag = 'smem constant byte address 0x4 - core index']
  #allocation1 [shape = 'u32[144,128]{1,0:T(1,128)}', space=vmem, size = 0x12000, scoped, tag = 'internal scratch']
  %s0 = inlined_call_operand.vmem [shape: f32[16,128], index: 0, kind: input, shape index: {}]
  %s1 = inlined_call_operand.vmem [shape: f32[16,16], index: 1, kind: input, shape index: {}]
  %s2 = inlined_call_operand.vmem [shape: f32[16,2], index: 2, kind: input, shape index: {}]
  %s3 = inlined_call_operand.vmem [shape: f32[2,16], index: 3, kind: input, shape index: {}]
  %s4 = inlined_call_operand.vmem [shape: f32[256,128], index: 4, kind: input, shape index: {}]
  %s5 = inlined_call_operand.vmem [shape: f32[1,128], index: 5, kind: input, shape index: {}]
  %s6 = inlined_call_operand.vmem [shape: f32[128,1], index: 6, kind: input, shape index: {}]
  %s7 = inlined_call_operand.vmem [shape: f32[256,128], index: 7, kind: input, shape index: {}]
  %s8 = inlined_call_operand.vmem [shape: f32[1,128], index: 8, kind: input, shape index: {}]
  %s9 = inlined_call_operand.vmem [shape: f32[128,1], index: 9, kind: input, shape index: {}]
  %s10 = inlined_call_operand.hbm [shape: f32[2,256], index: 10, kind: output, shape index: {}]
  %s11 = sld [smem:[#allocation0]]
  $region50: #{feature_extractor.1} parent=0
    _
  %s13 = ssub.s32 1, %s11
  %s14 = scalar_select 0, %s13, %s11
  $region1: #{feature_extractor.1} parent=0
    #allocation2 [shape = 'u8[2048]{0}', space=vmem, size = 0x800, scoped, tag = 'output window, operand 0, single buffered']
    #allocation3 [shape = 's32[1]{0}', space=sflag, size = 0x4, scoped, tag = 'scoped memory for feature_extractor.1']
    %15 = vsyncpa [#allocation3], 0
    // Predicated region
    $region2: #{feature_extractor.1} parent=1 // pred_check
      _
    $region3: #{feature_extractor.1} parent=1 // pred_check_branch
      %17 = sbr.rel (0) target = $region5
    $region4: #{feature_extractor.1} parent=1 // pred_region
      _
    $region5: #{feature_extractor.1} parent=1 // pred_fallthru
      _
    // Predicated region
    $region6: #{feature_extractor.1} parent=1 // pred_check
      _
    $region7: #{feature_extractor.1} parent=1 // pred_check_branch
      %19 = sbr.rel (0) target = $region9
    $region8: #{feature_extractor.1} parent=1 // pred_region
      _
    $region9: #{feature_extractor.1} parent=1 // pred_fallthru
      _
    // Predicated region
    $region10: #{feature_extractor.1} parent=1 // pred_check
      _
    $region11: #{feature_extractor.1} parent=1 // pred_check_branch
      %21 = sbr.rel (0) target = $region13
    $region12: #{feature_extractor.1} parent=1 // pred_region
      _
    $region13: #{feature_extractor.1} parent=1 // pred_fallthru
      _
    // Predicated region
    $region14: #{feature_extractor.1} parent=1 // pred_check
      _
    $region15: #{feature_extractor.1} parent=1 // pred_check_branch
      %23 = sbr.rel (0) target = $region17
    $region16: #{feature_extractor.1} parent=1 // pred_region
      _
    $region17: #{feature_extractor.1} parent=1 // pred_fallthru
      _
    // Predicated region
    $region18: #{feature_extractor.1} parent=1 // pred_check
      _
    $region19: #{feature_extractor.1} parent=1 // pred_check_branch
      %25 = sbr.rel (0) target = $region21
    $region20: #{feature_extractor.1} parent=1 // pred_region
      _
    $region21: #{feature_extractor.1} parent=1 // pred_fallthru
      _
    // Predicated region
    $region22: #{feature_extractor.1} parent=1 // pred_check
      _
    $region23: #{feature_extractor.1} parent=1 // pred_check_branch
      %27 = sbr.rel (0) target = $region25
    $region24: #{feature_extractor.1} parent=1 // pred_region
      _
    $region25: #{feature_extractor.1} parent=1 // pred_fallthru
      _
    // Predicated region
    $region26: #{feature_extractor.1} parent=1 // pred_check
      _
    $region27: #{feature_extractor.1} parent=1 // pred_check_branch
      %29 = sbr.rel (0) target = $region29
    $region28: #{feature_extractor.1} parent=1 // pred_region
      _
    $region29: #{feature_extractor.1} parent=1 // pred_fallthru
      _
    // Predicated region
    $region30: #{feature_extractor.1} parent=1 // pred_check
      _
    $region31: #{feature_extractor.1} parent=1 // pred_check_branch
      %31 = sbr.rel (0) target = $region33
    $region32: #{feature_extractor.1} parent=1 // pred_region
      _
    $region33: #{feature_extractor.1} parent=1 // pred_fallthru
      _
    // Predicated region
    $region34: #{feature_extractor.1} parent=1 // pred_check
      _
    $region35: #{feature_extractor.1} parent=1 // pred_check_branch
      %33 = sbr.rel (0) target = $region37
    $region36: #{feature_extractor.1} parent=1 // pred_region
      _
    $region37: #{feature_extractor.1} parent=1 // pred_fallthru
      _
    // Predicated region
    $region38: #{feature_extractor.1} parent=1 // pred_check
      _
    $region39: #{feature_extractor.1} parent=1 // pred_check_branch
      %35 = sbr.rel (0) target = $region41
    $region40: #{feature_extractor.1} parent=1 // pred_region
      _
    $region41: #{feature_extractor.1} parent=1 // pred_fallthru
      _
    %v36 = vld [vmem:[%s0] sm:$0xff]
    %v37 = vld [vmem:[%s0 + $0x8] sm:$0xff]
    %v38 = vld [vmem:[%s1] sm:$0xff]
    %v39 = vld [vmem:[%s1 + $0x8] sm:$0xff]
    %v40 = vld [vmem:[%s2] sm:$0xff]
    %v41 = vld [vmem:[%s2 + $0x8] sm:$0xff]
    %v42 = vld [vmem:[%s3] sm:$0x3]
    %vm43 = vcmask 15360
    %v44 = vsel %vm43, %v40, 0.0
    %45 = vadd.xlane.f32.xlu0 %v44
    %v46 = vpop.xlane.xlu0 %45
    %v47 = vsel %vm43, %v41, 0.0
    %48 = vadd.xlane.f32.xlu0 %v47
    %v49 = vpop.xlane.xlu0 %48
    %v51 = vsel %vm43, %v40, 0
    %v54 = vsel %vm43, %v41, 0
    %vm56 = vcmask 1041408
    %v58 = vsel %vm56, %v42, 0
    %60 = vmatprep.subr.mxu0 0.0
    %61 = vmatpush1.msra.mxu0 %v58
    %62 = vmatprep.subr.mxu0 0.0
    %63 = vmatpush1.msra.mxu0 0.0
    %64 = vmatprep.subr.mxu0 0.0
    %65 = vmatpush1.msra.mxu0 0.0
    %66 = vmatprep.subr.mxu0 0.0
    %67 = vmatpush1.msra.mxu0 0.0
    %68 = vmatprep.subr.mxu0 0.0
    %69 = vmatpush1.msra.mxu0 0.0
    %70 = vmatprep.subr.mxu0 0.0
    %71 = vmatpush1.msra.mxu0 0.0
    %72 = vmatprep.subr.mxu0 0.0
    %73 = vmatpush1.msra.mxu0 0.0
    %74 = vmatprep.subr.mxu0 0.0
    %75 = vmatpush1.msra.mxu0 0.0
    %76 = vmatprep.subr.mxu0 0.0
    %77 = vmatpush1.msra.mxu0 0.0
    %78 = vmatprep.subr.mxu0 0.0
    %79 = vmatpush1.msra.mxu0 0.0
    %80 = vmatprep.subr.mxu0 0.0
    %81 = vmatpush1.msra.mxu0 0.0
    %82 = vmatprep.subr.mxu0 0.0
    %83 = vmatpush1.msra.mxu0 0.0
    %84 = vmatprep.subr.mxu0 0.0
    %85 = vmatpush1.msra.mxu0 0.0
    %86 = vmatprep.subr.mxu0 0.0
    %87 = vmatpush1.msra.mxu0 0.0
    %88 = vmatprep.subr.mxu0 0.0
    %89 = vmatpush1.msra.mxu0 0.0
    %90 = vmatprep.subr.mxu0 0.0
    %91 = vmatpush1.msra.mxu0 0.0
    %92 = vmatprep.subr.mxu0 0.0
    %93 = vmatpush1.msra.mxu0 0.0
    %94 = vmatprep.subr.mxu0 0.0
    %95 = vmatpush1.msra.mxu0 0.0
    %96 = vmatprep.subr.mxu0 0.0
    %97 = vmatpush1.msra.mxu0 0.0
    %98 = vmatprep.subr.mxu0 0.0
    %99 = vmatpush1.msra.mxu0 0.0
    %100 = vmatprep.subr.mxu0 0.0
    %101 = vmatpush1.msra.mxu0 0.0
    %102 = vmatprep.subr.mxu0 0.0
    %103 = vmatpush1.msra.mxu0 0.0
    %104 = vmatprep.subr.mxu0 0.0
    %105 = vmatpush1.msra.mxu0 0.0
    %106 = vmatprep.subr.mxu0 0.0
    %107 = vmatpush1.msra.mxu0 0.0
    %108 = vmatprep.subr.mxu0 0.0
    %109 = vmatpush1.msra.mxu0 0.0
    %110 = vmatprep.subr.mxu0 0.0
    %111 = vmatpush1.msra.mxu0 0.0
    %112 = vmatprep.subr.mxu0 0.0
    %113 = vmatpush1.msra.mxu0 0.0
    %114 = vmatprep.subr.mxu0 0.0
    %115 = vmatpush1.msra.mxu0 0.0
    %116 = vmatprep.subr.mxu0 0.0
    %117 = vmatpush1.msra.mxu0 0.0
    %118 = vmatprep.subr.mxu0 0.0
    %119 = vmatpush1.msra.mxu0 0.0
    %120 = vmatprep.subr.mxu0 0.0
    %121 = vmatpush1.msra.mxu0 0.0
    %122 = vmatprep.subr.mxu0 0.0
    %123 = vmatpush1.msra.mxu0 0.0
    %124 = vmatprep.mubr.f32.mxu0 0.0
    %125 = vmatmul.mubr.f32.gmra.mrb[0].mxu0 %v51
    %v126 = vpop.f32.mrb[0].mxu0
    %v127 = vadd.f32 0.0, %v126
    %v128 = vpop.f32.mrb[0].mxu0
    %129 = vmatprep.mubr.f32.mxu0 0.0
    %130 = vmatmul.mubr.f32.gmra.mrb[0].mxu0 %v54
    %v131 = vpop.f32.mrb[0].mxu0
    %v132 = vadd.f32 0.0, %v131
    %v133 = vpop.f32.mrb[0].mxu0
    %134 = vdwg.mxu0
    %v135 = vlaneseq
    %v136 = vshrl.u32 %v135, 7
    %v137 = vadd.s32 %v136, 8
    %v138 = vlaneseq
    %v139 = vand.u32 %v138, 127
    %v140 = vmul.f32 %v36, %v46
    %v141 = vmul.f32 %v37, %v49
    %vm142 = vcmask 130048
    %v144 = vsel %vm142, %v38, 0
    %v147 = vsel %vm142, %v39, 0
    %149 = vmatprep.subr.mxu0 0.0
    %150 = vmatpush1.msra.mxu0 %v140
    %151 = vmatprep.subr.mxu0 0.0
    %152 = vmatpush1.msra.mxu0 %v141
    %153 = vmatprep.subr.mxu0 0.0
    %154 = vmatpush1.msra.mxu0 0.0
    %155 = vmatprep.subr.mxu0 0.0
    %156 = vmatpush1.msra.mxu0 0.0
    %157 = vmatprep.subr.mxu0 0.0
    %158 = vmatpush1.msra.mxu0 0.0
    %159 = vmatprep.subr.mxu0 0.0
    %160 = vmatpush1.msra.mxu0 0.0
    %161 = vmatprep.subr.mxu0 0.0
    %162 = vmatpush1.msra.mxu0 0.0
    %163 = vmatprep.subr.mxu0 0.0
    %164 = vmatpush1.msra.mxu0 0.0
    %165 = vmatprep.subr.mxu0 0.0
    %166 = vmatpush1.msra.mxu0 0.0
    %167 = vmatprep.subr.mxu0 0.0
    %168 = vmatpush1.msra.mxu0 0.0
    %169 = vmatprep.subr.mxu0 0.0
    %170 = vmatpush1.msra.mxu0 0.0
    %171 = vmatprep.subr.mxu0 0.0
    %172 = vmatpush1.msra.mxu0 0.0
    %173 = vmatprep.subr.mxu0 0.0
    %174 = vmatpush1.msra.mxu0 0.0
    %175 = vmatprep.subr.mxu0 0.0
    %176 = vmatpush1.msra.mxu0 0.0
    %177 = vmatprep.subr.mxu0 0.0
    %178 = vmatpush1.msra.mxu0 0.0
    %179 = vmatprep.subr.mxu0 0.0
    %180 = vmatpush1.msra.mxu0 0.0
    %181 = vmatprep.subr.mxu0 0.0
    %182 = vmatpush1.msra.mxu0 0.0
    %183 = vmatprep.subr.mxu0 0.0
    %184 = vmatpush1.msra.mxu0 0.0
    %185 = vmatprep.subr.mxu0 0.0
    %186 = vmatpush1.msra.mxu0 0.0
    %187 = vmatprep.subr.mxu0 0.0
    %188 = vmatpush1.msra.mxu0 0.0
    %189 = vmatprep.subr.mxu0 0.0
    %190 = vmatpush1.msra.mxu0 0.0
    %191 = vmatprep.subr.mxu0 0.0
    %192 = vmatpush1.msra.mxu0 0.0
    %193 = vmatprep.subr.mxu0 0.0
    %194 = vmatpush1.msra.mxu0 0.0
    %195 = vmatprep.subr.mxu0 0.0
    %196 = vmatpush1.msra.mxu0 0.0
    %197 = vmatprep.subr.mxu0 0.0
    %198 = vmatpush1.msra.mxu0 0.0
    %199 = vmatprep.subr.mxu0 0.0
    %200 = vmatpush1.msra.mxu0 0.0
    %201 = vmatprep.subr.mxu0 0.0
    %202 = vmatpush1.msra.mxu0 0.0
    %203 = vmatprep.subr.mxu0 0.0
    %204 = vmatpush1.msra.mxu0 0.0
    %205 = vmatprep.subr.mxu0 0.0
    %206 = vmatpush1.msra.mxu0 0.0
    %207 = vmatprep.subr.mxu0 0.0
    %208 = vmatpush1.msra.mxu0 0.0
    %209 = vmatprep.subr.mxu0 0.0
    %210 = vmatpush1.msra.mxu0 0.0
    %211 = vmatprep.subr.mxu0 0.0
    %212 = vmatpush1.msra.mxu0 0.0
    %213 = vmatprep.mubr.f32.mxu0 0.0
    %214 = vmatmul.mubr.f32.gmra.mrb[0].mxu0 %v144
    %v215 = vpop.f32.mrb[0].mxu0
    %v216 = vadd.f32 0.0, %v215
    %v217 = vpop.f32.mrb[0].mxu0
    %218 = vmatprep.mubr.f32.mxu0 0.0
    %219 = vmatmul.mubr.f32.gmra.mrb[0].mxu0 %v147
    %v220 = vpop.f32.mrb[0].mxu0
    %v221 = vadd.f32 0.0, %v220
    %v222 = vpop.f32.mrb[0].mxu0
    %223 = vdwg.mxu0
    %v224 = vmul.f32 %v46, %v216
    %v225 = vmul.f32 %v49, %v221
    %v226 = vld [vmem:[%s4] sm:$0xff]
    %v227 = vld [vmem:[%s4 + $0x8] sm:$0xff]
    %v228 = vld [vmem:[%s4 + $0x10] sm:$0xff]
    %v229 = vld [vmem:[%s4 + $0x18] sm:$0xff]
    %v230 = vld [vmem:[%s4 + $0x20] sm:$0xff]
    %v231 = vld [vmem:[%s4 + $0x28] sm:$0xff]
    %v232 = vld [vmem:[%s4 + $0x30] sm:$0xff]
    %v233 = vld [vmem:[%s4 + $0x38] sm:$0xff]
    %v234 = vld [vmem:[%s4 + $0x40] sm:$0xff]
    %v235 = vld [vmem:[%s4 + $0x48] sm:$0xff]
    %v236 = vld [vmem:[%s4 + $0x50] sm:$0xff]
    %v237 = vld [vmem:[%s4 + $0x58] sm:$0xff]
    %v238 = vld [vmem:[%s4 + $0x60] sm:$0xff]
    %v239 = vld [vmem:[%s4 + $0x68] sm:$0xff]
    %v240 = vld [vmem:[%s4 + $0x70] sm:$0xff]
    %v241 = vld [vmem:[%s4 + $0x78] sm:$0xff]
    %v242 = vld [vmem:[%s4 + $0x80] sm:$0xff]
    %v243 = vld [vmem:[%s4 + $0x88] sm:$0xff]
    %v244 = vld [vmem:[%s4 + $0x90] sm:$0xff]
    %v245 = vld [vmem:[%s4 + $0x98] sm:$0xff]
    %v246 = vld [vmem:[%s4 + $0xa0] sm:$0xff]
    %v247 = vld [vmem:[%s4 + $0xa8] sm:$0xff]
    %v248 = vld [vmem:[%s4 + $0xb0] sm:$0xff]
    %v249 = vld [vmem:[%s4 + $0xb8] sm:$0xff]
    %v250 = vld [vmem:[%s4 + $0xc0] sm:$0xff]
    %v251 = vld [vmem:[%s4 + $0xc8] sm:$0xff]
    %v252 = vld [vmem:[%s4 + $0xd0] sm:$0xff]
    %v253 = vld [vmem:[%s4 + $0xd8] sm:$0xff]
    %v254 = vld [vmem:[%s4 + $0xe0] sm:$0xff]
    %v255 = vld [vmem:[%s4 + $0xe8] sm:$0xff]
    %v256 = vld [vmem:[%s4 + $0xf0] sm:$0xff]
    %v257 = vld [vmem:[%s4 + $0xf8] sm:$0xff]
    %v258 = vld [vmem:[%s5] sm:$0x1]
    %v260 = vlaneseq
    %v261 = vshrl.u32 %v260, 7
    %v262 = vsub.s32 0, %v261
    %v263 = vrot.slane %v258, %v262
    %265 = vmatprep.subr.mxu0 0.0
    %266 = vmatpush1.msra.mxu0 %v226
    %267 = vmatprep.subr.mxu0 0.0
    %268 = vmatpush1.msra.mxu0 %v227
    %269 = vmatprep.subr.mxu0 0.0
    %270 = vmatpush1.msra.mxu0 %v228
    %271 = vmatprep.subr.mxu0 0.0
    %272 = vmatpush1.msra.mxu0 %v229
    %273 = vmatprep.subr.mxu0 0.0
    %274 = vmatpush1.msra.mxu0 %v230
    %275 = vmatprep.subr.mxu0 0.0
    %276 = vmatpush1.msra.mxu0 %v231
    %277 = vmatprep.subr.mxu0 0.0
    %278 = vmatpush1.msra.mxu0 %v232
    %279 = vmatprep.subr.mxu0 0.0
    %280 = vmatpush1.msra.mxu0 %v233
    %281 = vmatprep.subr.mxu0 0.0
    %282 = vmatpush1.msra.mxu0 %v234
    %283 = vmatprep.subr.mxu0 0.0
    %284 = vmatpush1.msra.mxu0 %v235
    %285 = vmatprep.subr.mxu0 0.0
    %286 = vmatpush1.msra.mxu0 %v236
    %287 = vmatprep.subr.mxu0 0.0
    %288 = vmatpush1.msra.mxu0 %v237
    %289 = vmatprep.subr.mxu0 0.0
    %290 = vmatpush1.msra.mxu0 %v238
    %291 = vmatprep.subr.mxu0 0.0
    %292 = vmatpush1.msra.mxu0 %v239
    %293 = vmatprep.subr.mxu0 0.0
    %294 = vmatpush1.msra.mxu0 %v240
    %295 = vmatprep.subr.mxu0 0.0
    %296 = vmatpush1.msra.mxu0 %v241
    %297 = vmatprep.subr.mxu0 0.0
    %298 = vmatpush1.msra.mxu0 %v242
    %299 = vmatprep.subr.mxu0 0.0
    %300 = vmatpush1.msra.mxu0 %v243
    %301 = vmatprep.subr.mxu0 0.0
    %302 = vmatpush1.msra.mxu0 %v244
    %303 = vmatprep.subr.mxu0 0.0
    %304 = vmatpush1.msra.mxu0 %v245
    %305 = vmatprep.subr.mxu0 0.0
    %306 = vmatpush1.msra.mxu0 %v246
    %307 = vmatprep.subr.mxu0 0.0
    %308 = vmatpush1.msra.mxu0 %v247
    %309 = vmatprep.subr.mxu0 0.0
    %310 = vmatpush1.msra.mxu0 %v248
    %311 = vmatprep.subr.mxu0 0.0
    %312 = vmatpush1.msra.mxu0 %v249
    %313 = vmatprep.subr.mxu0 0.0
    %314 = vmatpush1.msra.mxu0 %v250
    %315 = vmatprep.subr.mxu0 0.0
    %316 = vmatpush1.msra.mxu0 %v251
    %317 = vmatprep.subr.mxu0 0.0
    %318 = vmatpush1.msra.mxu0 %v252
    %319 = vmatprep.subr.mxu0 0.0
    %320 = vmatpush1.msra.mxu0 %v253
    %321 = vmatprep.subr.mxu0 0.0
    %322 = vmatpush1.msra.mxu0 %v254
    %323 = vmatprep.subr.mxu0 0.0
    %324 = vmatpush1.msra.mxu0 %v255
    %325 = vmatprep.subr.mxu0 0.0
    %326 = vmatpush1.msra.mxu0 %v256
    %327 = vmatprep.subr.mxu0 0.0
    %328 = vmatpush1.msra.mxu0 %v257
    %329 = vmatprep.mubr.f32.mxu0 %v224
    %330 = vmatmul.mubr.f32.gmra.mrb[0].mxu0 %v36
    %v331 = vpop.f32.mrb[0].mxu0
    %v332 = vadd.f32 %v263, %v331
    %v333 = vpop.f32.mrb[0].mxu0
    %334 = vmatprep.mubr.f32.mxu0 %v225
    %335 = vmatmul.mubr.f32.gmra.mrb[0].mxu0 %v37
    %v336 = vpop.f32.mrb[0].mxu0
    %v337 = vadd.f32 %v263, %v336
    %v338 = vpop.f32.mrb[0].mxu0
    %339 = vdwg.mxu0
    %v340 = vmax.f32 %v332, 0.0
    %v341 = vmax.f32 %v337, 0.0
    %v342 = vld [vmem:[%s6] sm:$0xff]
    %v343 = vld [vmem:[%s6 + $0x8] sm:$0xff]
    %v344 = vld [vmem:[%s6 + $0x10] sm:$0xff]
    %v345 = vld [vmem:[%s6 + $0x18] sm:$0xff]
    %v346 = vld [vmem:[%s6 + $0x20] sm:$0xff]
    %v347 = vld [vmem:[%s6 + $0x28] sm:$0xff]
    %v348 = vld [vmem:[%s6 + $0x30] sm:$0xff]
    %v349 = vld [vmem:[%s6 + $0x38] sm:$0xff]
    %v350 = vld [vmem:[%s6 + $0x40] sm:$0xff]
    %v351 = vld [vmem:[%s6 + $0x48] sm:$0xff]
    %v352 = vld [vmem:[%s6 + $0x50] sm:$0xff]
    %v353 = vld [vmem:[%s6 + $0x58] sm:$0xff]
    %v354 = vld [vmem:[%s6 + $0x60] sm:$0xff]
    %v355 = vld [vmem:[%s6 + $0x68] sm:$0xff]
    %v356 = vld [vmem:[%s6 + $0x70] sm:$0xff]
    %v357 = vld [vmem:[%s6 + $0x78] sm:$0xff]
    %358 = vmatprep.subr.mxu0 0.0
    %359 = vmatpush1.msra.mxu0 %v342
    %360 = vmatprep.subr.mxu0 0.0
    %361 = vmatpush1.msra.mxu0 %v343
    %362 = vmatprep.subr.mxu0 0.0
    %363 = vmatpush1.msra.mxu0 %v344
    %364 = vmatprep.subr.mxu0 0.0
    %365 = vmatpush1.msra.mxu0 %v345
    %366 = vmatprep.subr.mxu0 0.0
    %367 = vmatpush1.msra.mxu0 %v346
    %368 = vmatprep.subr.mxu0 0.0
    %369 = vmatpush1.msra.mxu0 %v347
    %370 = vmatprep.subr.mxu0 0.0
    %371 = vmatpush1.msra.mxu0 %v348
    %372 = vmatprep.subr.mxu0 0.0
    %373 = vmatpush1.msra.mxu0 %v349
    %374 = vmatprep.subr.mxu0 0.0
    %375 = vmatpush1.msra.mxu0 %v350
    %376 = vmatprep.subr.mxu0 0.0
    %377 = vmatpush1.msra.mxu0 %v351
    %378 = vmatprep.subr.mxu0 0.0
    %379 = vmatpush1.msra.mxu0 %v352
    %380 = vmatprep.subr.mxu0 0.0
    %381 = vmatpush1.msra.mxu0 %v353
    %382 = vmatprep.subr.mxu0 0.0
    %383 = vmatpush1.msra.mxu0 %v354
    %384 = vmatprep.subr.mxu0 0.0
    %385 = vmatpush1.msra.mxu0 %v355
    %386 = vmatprep.subr.mxu0 0.0
    %387 = vmatpush1.msra.mxu0 %v356
    %388 = vmatprep.subr.mxu0 0.0
    %389 = vmatpush1.msra.mxu0 %v357
    %390 = vmatprep.subr.mxu0 0.0
    %391 = vmatpush1.msra.mxu0 0.0
    %392 = vmatprep.subr.mxu0 0.0
    %393 = vmatpush1.msra.mxu0 0.0
    %394 = vmatprep.subr.mxu0 0.0
    %395 = vmatpush1.msra.mxu0 0.0
    %396 = vmatprep.subr.mxu0 0.0
    %397 = vmatpush1.msra.mxu0 0.0
    %398 = vmatprep.subr.mxu0 0.0
    %399 = vmatpush1.msra.mxu0 0.0
    %400 = vmatprep.subr.mxu0 0.0
    %401 = vmatpush1.msra.mxu0 0.0
    %402 = vmatprep.subr.mxu0 0.0
    %403 = vmatpush1.msra.mxu0 0.0
    %404 = vmatprep.subr.mxu0 0.0
    %405 = vmatpush1.msra.mxu0 0.0
    %406 = vmatprep.subr.mxu0 0.0
    %407 = vmatpush1.msra.mxu0 0.0
    %408 = vmatprep.subr.mxu0 0.0
    %409 = vmatpush1.msra.mxu0 0.0
    %410 = vmatprep.subr.mxu0 0.0
    %411 = vmatpush1.msra.mxu0 0.0
    %412 = vmatprep.subr.mxu0 0.0
    %413 = vmatpush1.msra.mxu0 0.0
    %414 = vmatprep.subr.mxu0 0.0
    %415 = vmatpush1.msra.mxu0 0.0
    %416 = vmatprep.subr.mxu0 0.0
    %417 = vmatpush1.msra.mxu0 0.0
    %418 = vmatprep.subr.mxu0 0.0
    %419 = vmatpush1.msra.mxu0 0.0
    %420 = vmatprep.subr.mxu0 0.0
    %421 = vmatpush1.msra.mxu0 0.0
    %422 = vmatprep.mubr.f32.mxu0 0.0
    %423 = vmatmul.mubr.f32.gmra.mrb[0].mxu0 %v340
    %v424 = vpop.f32.mrb[0].mxu0
    %v425 = vadd.f32 0.0, %v424
    %v426 = vpop.f32.mrb[0].mxu0
    %427 = vmatprep.mubr.f32.mxu0 0.0
    %428 = vmatmul.mubr.f32.gmra.mrb[0].mxu0 %v341
    %v429 = vpop.f32.mrb[0].mxu0
    %v430 = vadd.f32 0.0, %v429
    %v431 = vpop.f32.mrb[0].mxu0
    %432 = vdwg.mxu0
    %v433 = vtanh.pop %v425
    %v434 = vtanh.pop %v430
    %v435 = vsel %vm142, %v42, 0
    %437 = vmatprep.subr.mxu0 0.0
    %438 = vmatpush1.msra.mxu0 %v46
    %439 = vmatprep.subr.mxu0 0.0
    %440 = vmatpush1.msra.mxu0 %v49
    %441 = vmatprep.subr.mxu0 0.0
    %442 = vmatpush1.msra.mxu0 0.0
    %443 = vmatprep.subr.mxu0 0.0
    %444 = vmatpush1.msra.mxu0 0.0
    %445 = vmatprep.subr.mxu0 0.0
    %446 = vmatpush1.msra.mxu0 0.0
    %447 = vmatprep.subr.mxu0 0.0
    %448 = vmatpush1.msra.mxu0 0.0
    %449 = vmatprep.subr.mxu0 0.0
    %450 = vmatpush1.msra.mxu0 0.0
    %451 = vmatprep.subr.mxu0 0.0
    %452 = vmatpush1.msra.mxu0 0.0
    %453 = vmatprep.subr.mxu0 0.0
    %454 = vmatpush1.msra.mxu0 0.0
    %455 = vmatprep.subr.mxu0 0.0
    %456 = vmatpush1.msra.mxu0 0.0
    %457 = vmatprep.subr.mxu0 0.0
    %458 = vmatpush1.msra.mxu0 0.0
    %459 = vmatprep.subr.mxu0 0.0
    %460 = vmatpush1.msra.mxu0 0.0
    %461 = vmatprep.subr.mxu0 0.0
    %462 = vmatpush1.msra.mxu0 0.0
    %463 = vmatprep.subr.mxu0 0.0
    %464 = vmatpush1.msra.mxu0 0.0
    %465 = vmatprep.subr.mxu0 0.0
    %466 = vmatpush1.msra.mxu0 0.0
    %467 = vmatprep.subr.mxu0 0.0
    %468 = vmatpush1.msra.mxu0 0.0
    %469 = vmatprep.subr.mxu0 0.0
    %470 = vmatpush1.msra.mxu0 0.0
    %471 = vmatprep.subr.mxu0 0.0
    %472 = vmatpush1.msra.mxu0 0.0
    %473 = vmatprep.subr.mxu0 0.0
    %474 = vmatpush1.msra.mxu0 0.0
    %475 = vmatprep.subr.mxu0 0.0
    %476 = vmatpush1.msra.mxu0 0.0
    %477 = vmatprep.subr.mxu0 0.0
    %478 = vmatpush1.msra.mxu0 0.0
    %479 = vmatprep.subr.mxu0 0.0
    %480 = vmatpush1.msra.mxu0 0.0
    %481 = vmatprep.subr.mxu0 0.0
    %482 = vmatpush1.msra.mxu0 0.0
    %483 = vmatprep.subr.mxu0 0.0
    %484 = vmatpush1.msra.mxu0 0.0
    %485 = vmatprep.subr.mxu0 0.0
    %486 = vmatpush1.msra.mxu0 0.0
    %487 = vmatprep.subr.mxu0 0.0
    %488 = vmatpush1.msra.mxu0 0.0
    %489 = vmatprep.subr.mxu0 0.0
    %490 = vmatpush1.msra.mxu0 0.0
    %491 = vmatprep.subr.mxu0 0.0
    %492 = vmatpush1.msra.mxu0 0.0
    %493 = vmatprep.subr.mxu0 0.0
    %494 = vmatpush1.msra.mxu0 0.0
    %495 = vmatprep.subr.mxu0 0.0
    %496 = vmatpush1.msra.mxu0 0.0
    %497 = vmatprep.subr.mxu0 0.0
    %498 = vmatpush1.msra.mxu0 0.0
    %499 = vmatprep.subr.mxu0 0.0
    %500 = vmatpush1.msra.mxu0 0.0
    %501 = vmatprep.mubr.f32.mxu0 0.0
    %502 = vmatmul.mubr.f32.gmra.mrb[0].mxu0 %v435
    %v503 = vpop.f32.mrb[0].mxu0
    %v504 = vadd.f32 0.0, %v503
    %v505 = vpop.f32.mrb[0].mxu0
    %506 = vdwg.mxu0
    %v507 = vmul.f32 %v504, 0.8
    %v508 = vceil.f32 %v507
    %v510 = vsel %vm56, %v508, 0
    %512 = vmatprep.subr.mxu0 0.0
    %513 = vmatpush1.msra.mxu0 %v510
    %514 = vmatprep.subr.mxu0 0.0
    %515 = vmatpush1.msra.mxu0 0.0
    %516 = vmatprep.subr.mxu0 0.0
    %517 = vmatpush1.msra.mxu0 0.0
    %518 = vmatprep.subr.mxu0 0.0
    %519 = vmatpush1.msra.mxu0 0.0
    %520 = vmatprep.subr.mxu0 0.0
    %521 = vmatpush1.msra.mxu0 0.0
    %522 = vmatprep.subr.mxu0 0.0
    %523 = vmatpush1.msra.mxu0 0.0
    %524 = vmatprep.subr.mxu0 0.0
    %525 = vmatpush1.msra.mxu0 0.0
    %526 = vmatprep.subr.mxu0 0.0
    %527 = vmatpush1.msra.mxu0 0.0
    %528 = vmatprep.subr.mxu0 0.0
    %529 = vmatpush1.msra.mxu0 0.0
    %530 = vmatprep.subr.mxu0 0.0
    %531 = vmatpush1.msra.mxu0 0.0
    %532 = vmatprep.subr.mxu0 0.0
    %533 = vmatpush1.msra.mxu0 0.0
    %534 = vmatprep.subr.mxu0 0.0
    %535 = vmatpush1.msra.mxu0 0.0
    %536 = vmatprep.subr.mxu0 0.0
    %537 = vmatpush1.msra.mxu0 0.0
    %538 = vmatprep.subr.mxu0 0.0
    %539 = vmatpush1.msra.mxu0 0.0
    %540 = vmatprep.subr.mxu0 0.0
    %541 = vmatpush1.msra.mxu0 0.0
    %542 = vmatprep.subr.mxu0 0.0
    %543 = vmatpush1.msra.mxu0 0.0
    %544 = vmatprep.subr.mxu0 0.0
    %545 = vmatpush1.msra.mxu0 0.0
    %546 = vmatprep.subr.mxu0 0.0
    %547 = vmatpush1.msra.mxu0 0.0
    %548 = vmatprep.subr.mxu0 0.0
    %549 = vmatpush1.msra.mxu0 0.0
    %550 = vmatprep.subr.mxu0 0.0
    %551 = vmatpush1.msra.mxu0 0.0
    %552 = vmatprep.subr.mxu0 0.0
    %553 = vmatpush1.msra.mxu0 0.0
    %554 = vmatprep.subr.mxu0 0.0
    %555 = vmatpush1.msra.mxu0 0.0
    %556 = vmatprep.subr.mxu0 0.0
    %557 = vmatpush1.msra.mxu0 0.0
    %558 = vmatprep.subr.mxu0 0.0
    %559 = vmatpush1.msra.mxu0 0.0
    %560 = vmatprep.subr.mxu0 0.0
    %561 = vmatpush1.msra.mxu0 0.0
    %562 = vmatprep.subr.mxu0 0.0
    %563 = vmatpush1.msra.mxu0 0.0
    %564 = vmatprep.subr.mxu0 0.0
    %565 = vmatpush1.msra.mxu0 0.0
    %566 = vmatprep.subr.mxu0 0.0
    %567 = vmatpush1.msra.mxu0 0.0
    %568 = vmatprep.subr.mxu0 0.0
    %569 = vmatpush1.msra.mxu0 0.0
    %570 = vmatprep.subr.mxu0 0.0
    %571 = vmatpush1.msra.mxu0 0.0
    %572 = vmatprep.subr.mxu0 0.0
    %573 = vmatpush1.msra.mxu0 0.0
    %574 = vmatprep.subr.mxu0 0.0
    %575 = vmatpush1.msra.mxu0 0.0
    %576 = vmatprep.mubr.f32.mxu0 0.0
    %577 = vmatmul.mubr.f32.gmra.mrb[0].mxu0 %v51
    %v578 = vpop.f32.mrb[0].mxu0
    %v579 = vadd.f32 0.0, %v578
    %v580 = vpop.f32.mrb[0].mxu0
    %581 = vmatprep.mubr.f32.mxu0 0.0
    %582 = vmatmul.mubr.f32.gmra.mrb[0].mxu0 %v54
    %v583 = vpop.f32.mrb[0].mxu0
    %v584 = vadd.f32 0.0, %v583
    %v585 = vpop.f32.mrb[0].mxu0
    %586 = vdwg.mxu0
    %587 = vxpose.xlu0.b32.start [1/16] %v433, 128
    %588 = vxpose.xlu0.b32.cont [2/16] %v434, 128
    %589 = vxpose.xlu0.b32.cont [3/16] 0.0, 128
    %590 = vxpose.xlu0.b32.cont [4/16] 0.0, 128
    %591 = vxpose.xlu0.b32.cont [5/16] 0.0, 128
    %592 = vxpose.xlu0.b32.cont [6/16] 0.0, 128
    %593 = vxpose.xlu0.b32.cont [7/16] 0.0, 128
    %594 = vxpose.xlu0.b32.cont [8/16] 0.0, 128
    %595 = vxpose.xlu0.b32.cont [9/16] 0.0, 128
    %596 = vxpose.xlu0.b32.cont [10/16] 0.0, 128
    %597 = vxpose.xlu0.b32.cont [11/16] 0.0, 128
    %598 = vxpose.xlu0.b32.cont [12/16] 0.0, 128
    %599 = vxpose.xlu0.b32.cont [13/16] 0.0, 128
    %600 = vxpose.xlu0.b32.cont [14/16] 0.0, 128
    %601 = vxpose.xlu0.b32.cont [15/16] 0.0, 128
    %602 = vxpose.xlu0.b32.end [16/16] 0.0, 128
    %v603 = vpop.trf.xlu0
    %v604 = vpop.trf.xlu0
    %v605 = vpop.trf.xlu0
    %v606 = vpop.trf.xlu0
    %v607 = vpop.trf.xlu0
    %v608 = vpop.trf.xlu0
    %v609 = vpop.trf.xlu0
    %v610 = vpop.trf.xlu0
    %v611 = vpop.trf.xlu0
    %v612 = vpop.trf.xlu0
    %v613 = vpop.trf.xlu0
    %v614 = vpop.trf.xlu0
    %v615 = vpop.trf.xlu0
    %v616 = vpop.trf.xlu0
    %v617 = vpop.trf.xlu0
    %v618 = vpop.trf.xlu0
    %v619 = vlaneseq
    %v620 = vshrl.u32 %v619, 7
    %v621 = vsub.s32 0, %v620
    %v622 = vrot.slane %v603, %v621
    %624 = vset.pattern.permute.xlu0 0
    %625 = vperm.xlu0 %624, %v433
    %v626 = vpop.permute.xlu0 %625
    %629 = vset.pattern.permute.xlu0 0
    %630 = vperm.xlu0 %629, %v434
    %v631 = vpop.permute.xlu0 %630
    %vm633 = vcmp.gt.f32.partialorder %v622, %v626
    %vm634 = vcmp.gt.f32.partialorder %v622, %v631
    %vm635 = vcmp.eq.f32.partialorder %v622, %v626
    %vm636 = vcmp.eq.f32.partialorder %v622, %v631
    %vm637 = vcmp.lt.s32.totalorder %v139, %v136
    %vm638 = vcmp.lt.s32.totalorder %v139, %v137
    %vm639 = vmand %vm635, %vm637
    %vm640 = vmand %vm636, %vm638
    %vm641 = vmor %vm633, %vm639
    %vm642 = vmor %vm634, %vm640
    %v643 = vsel %vm641, 1.0, 0.0
    %v644 = vsel %vm642, 1.0, 0.0
    %645 = vxpose.xlu0.b32.start [1/16] %v46, 128
    %646 = vxpose.xlu0.b32.cont [2/16] %v49, 128
    %647 = vxpose.xlu0.b32.cont [3/16] 0.0, 128
    %648 = vxpose.xlu0.b32.cont [4/16] 0.0, 128
    %649 = vxpose.xlu0.b32.cont [5/16] 0.0, 128
    %650 = vxpose.xlu0.b32.cont [6/16] 0.0, 128
    %651 = vxpose.xlu0.b32.cont [7/16] 0.0, 128
    %652 = vxpose.xlu0.b32.cont [8/16] 0.0, 128
    %653 = vxpose.xlu0.b32.cont [9/16] 0.0, 128
    %654 = vxpose.xlu0.b32.cont [10/16] 0.0, 128
    %655 = vxpose.xlu0.b32.cont [11/16] 0.0, 128
    %656 = vxpose.xlu0.b32.cont [12/16] 0.0, 128
    %657 = vxpose.xlu0.b32.cont [13/16] 0.0, 128
    %658 = vxpose.xlu0.b32.cont [14/16] 0.0, 128
    %659 = vxpose.xlu0.b32.cont [15/16] 0.0, 128
    %660 = vxpose.xlu0.b32.end [16/16] 0.0, 128
    %v661 = vpop.trf.xlu0
    %v662 = vpop.trf.xlu0
    %v663 = vpop.trf.xlu0
    %v664 = vpop.trf.xlu0
    %v665 = vpop.trf.xlu0
    %v666 = vpop.trf.xlu0
    %v667 = vpop.trf.xlu0
    %v668 = vpop.trf.xlu0
    %v669 = vpop.trf.xlu0
    %v670 = vpop.trf.xlu0
    %v671 = vpop.trf.xlu0
    %v672 = vpop.trf.xlu0
    %v673 = vpop.trf.xlu0
    %v674 = vpop.trf.xlu0
    %v675 = vpop.trf.xlu0
    %v676 = vpop.trf.xlu0
    %v677 = vlaneseq
    %v678 = vshrl.u32 %v677, 7
    %v679 = vsub.s32 0, %v678
    %v680 = vrot.slane %v661, %v679
    %v681 = vmul.f32 %v127, %v680
    %v682 = vmul.f32 %v132, %v680
    %v683 = vmul.f32 %v681, %v643
    %v684 = vmul.f32 %v682, %v644
    %v685 = vsel %vm142, %v683, 0.0
    %686 = vadd.xlane.f32.xlu0 %v685
    %v687 = vpop.xlane.xlu0 %686
    %v688 = vsel %vm142, %v684, 0.0
    %689 = vadd.xlane.f32.xlu0 %v688
    %v690 = vpop.xlane.xlu0 %689
    %vm691 = vcmp.lt.f32.partialorder %v687, %v579
    %vm692 = vcmp.lt.f32.partialorder %v690, %v584
    %vm693 = vcmp.gt.f32.partialorder %v46, 0.0
    %vm694 = vcmp.gt.f32.partialorder %v49, 0.0
    %vm695 = vmand %vm691, %vm693
    %vm696 = vmand %vm692, %vm694
    %v697 = vsel %vm695, 1.0, 0.0
    %v698 = vsel %vm696, 1.0, 0.0
    %v699 = vmul.f32 %v340, %v626
    %v700 = vmul.f32 %v341, %v631
    %702 = vset.pattern.permute.xlu0 0
    %703 = vperm.xlu0 %702, %v697
    %v704 = vpop.permute.xlu0 %703
    %707 = vset.pattern.permute.xlu0 0
    %708 = vperm.xlu0 %707, %v698
    %v709 = vpop.permute.xlu0 %708
    %v711 = vmul.f32 %v699, %v704
    %v712 = vmul.f32 %v700, %v709
    %v713 = vmul.f32 %v711, %v704
    %v714 = vmul.f32 %v712, %v709
    %715 = vmatprep.subr.mxu0 0.0
    %716 = vmatpush1.msra.mxu0 %v713
    %717 = vmatprep.subr.mxu0 0.0
    %718 = vmatpush1.msra.mxu0 %v714
    %719 = vmatprep.subr.mxu0 0.0
    %720 = vmatpush1.msra.mxu0 0.0
    %721 = vmatprep.subr.mxu0 0.0
    %722 = vmatpush1.msra.mxu0 0.0
    %723 = vmatprep.subr.mxu0 0.0
    %724 = vmatpush1.msra.mxu0 0.0
    %725 = vmatprep.subr.mxu0 0.0
    %726 = vmatpush1.msra.mxu0 0.0
    %727 = vmatprep.subr.mxu0 0.0
    %728 = vmatpush1.msra.mxu0 0.0
    %729 = vmatprep.subr.mxu0 0.0
    %730 = vmatpush1.msra.mxu0 0.0
    %731 = vmatprep.subr.mxu0 0.0
    %732 = vmatpush1.msra.mxu0 0.0
    %733 = vmatprep.subr.mxu0 0.0
    %734 = vmatpush1.msra.mxu0 0.0
    %735 = vmatprep.subr.mxu0 0.0
    %736 = vmatpush1.msra.mxu0 0.0
    %737 = vmatprep.subr.mxu0 0.0
    %738 = vmatpush1.msra.mxu0 0.0
    %739 = vmatprep.subr.mxu0 0.0
    %740 = vmatpush1.msra.mxu0 0.0
    %741 = vmatprep.subr.mxu0 0.0
    %742 = vmatpush1.msra.mxu0 0.0
    %743 = vmatprep.subr.mxu0 0.0
    %744 = vmatpush1.msra.mxu0 0.0
    %745 = vmatprep.subr.mxu0 0.0
    %746 = vmatpush1.msra.mxu0 0.0
    %747 = vmatprep.subr.mxu0 0.0
    %748 = vmatpush1.msra.mxu0 0.0
    %749 = vmatprep.subr.mxu0 0.0
    %750 = vmatpush1.msra.mxu0 0.0
    %751 = vmatprep.subr.mxu0 0.0
    %752 = vmatpush1.msra.mxu0 0.0
    %753 = vmatprep.subr.mxu0 0.0
    %754 = vmatpush1.msra.mxu0 0.0
    %755 = vmatprep.subr.mxu0 0.0
    %756 = vmatpush1.msra.mxu0 0.0
    %757 = vmatprep.subr.mxu0 0.0
    %758 = vmatpush1.msra.mxu0 0.0
    %759 = vmatprep.subr.mxu0 0.0
    %760 = vmatpush1.msra.mxu0 0.0
    %761 = vmatprep.subr.mxu0 0.0
    %762 = vmatpush1.msra.mxu0 0.0
    %763 = vmatprep.subr.mxu0 0.0
    %764 = vmatpush1.msra.mxu0 0.0
    %765 = vmatprep.subr.mxu0 0.0
    %766 = vmatpush1.msra.mxu0 0.0
    %767 = vmatprep.subr.mxu0 0.0
    %768 = vmatpush1.msra.mxu0 0.0
    %769 = vmatprep.subr.mxu0 0.0
    %770 = vmatpush1.msra.mxu0 0.0
    %771 = vmatprep.subr.mxu0 0.0
    %772 = vmatpush1.msra.mxu0 0.0
    %773 = vmatprep.subr.mxu0 0.0
    %774 = vmatpush1.msra.mxu0 0.0
    %775 = vmatprep.subr.mxu0 0.0
    %776 = vmatpush1.msra.mxu0 0.0
    %777 = vmatprep.subr.mxu0 0.0
    %778 = vmatpush1.msra.mxu0 0.0
    %779 = vmatprep.mubr.f32.mxu0 0.0
    %780 = vmatmul.mubr.f32.gmra.mrb[0].mxu0 %v435
    %v781 = vpop.f32.mrb[0].mxu0
    %v782 = vadd.f32 0.0, %v781
    %v783 = vpop.f32.mrb[0].mxu0
    %784 = vdwg.mxu0
    %785 = vmatprep.subr.mxu0 0.0
    %786 = vmatpush1.msra.mxu0 %v697
    %787 = vmatprep.subr.mxu0 0.0
    %788 = vmatpush1.msra.mxu0 %v698
    %789 = vmatprep.subr.mxu0 0.0
    %790 = vmatpush1.msra.mxu0 0.0
    %791 = vmatprep.subr.mxu0 0.0
    %792 = vmatpush1.msra.mxu0 0.0
    %793 = vmatprep.subr.mxu0 0.0
    %794 = vmatpush1.msra.mxu0 0.0
    %795 = vmatprep.subr.mxu0 0.0
    %796 = vmatpush1.msra.mxu0 0.0
    %797 = vmatprep.subr.mxu0 0.0
    %798 = vmatpush1.msra.mxu0 0.0
    %799 = vmatprep.subr.mxu0 0.0
    %800 = vmatpush1.msra.mxu0 0.0
    %801 = vmatprep.subr.mxu0 0.0
    %802 = vmatpush1.msra.mxu0 0.0
    %803 = vmatprep.subr.mxu0 0.0
    %804 = vmatpush1.msra.mxu0 0.0
    %805 = vmatprep.subr.mxu0 0.0
    %806 = vmatpush1.msra.mxu0 0.0
    %807 = vmatprep.subr.mxu0 0.0
    %808 = vmatpush1.msra.mxu0 0.0
    %809 = vmatprep.subr.mxu0 0.0
    %810 = vmatpush1.msra.mxu0 0.0
    %811 = vmatprep.subr.mxu0 0.0
    %812 = vmatpush1.msra.mxu0 0.0
    %813 = vmatprep.subr.mxu0 0.0
    %814 = vmatpush1.msra.mxu0 0.0
    %815 = vmatprep.subr.mxu0 0.0
    %816 = vmatpush1.msra.mxu0 0.0
    %817 = vmatprep.subr.mxu0 0.0
    %818 = vmatpush1.msra.mxu0 0.0
    %819 = vmatprep.subr.mxu0 0.0
    %820 = vmatpush1.msra.mxu0 0.0
    %821 = vmatprep.subr.mxu0 0.0
    %822 = vmatpush1.msra.mxu0 0.0
    %823 = vmatprep.subr.mxu0 0.0
    %824 = vmatpush1.msra.mxu0 0.0
    %825 = vmatprep.subr.mxu0 0.0
    %826 = vmatpush1.msra.mxu0 0.0
    %827 = vmatprep.subr.mxu0 0.0
    %828 = vmatpush1.msra.mxu0 0.0
    %829 = vmatprep.subr.mxu0 0.0
    %830 = vmatpush1.msra.mxu0 0.0
    %831 = vmatprep.subr.mxu0 0.0
    %832 = vmatpush1.msra.mxu0 0.0
    %833 = vmatprep.subr.mxu0 0.0
    %834 = vmatpush1.msra.mxu0 0.0
    %835 = vmatprep.subr.mxu0 0.0
    %836 = vmatpush1.msra.mxu0 0.0
    %837 = vmatprep.subr.mxu0 0.0
    %838 = vmatpush1.msra.mxu0 0.0
    %839 = vmatprep.subr.mxu0 0.0
    %840 = vmatpush1.msra.mxu0 0.0
    %841 = vmatprep.subr.mxu0 0.0
    %842 = vmatpush1.msra.mxu0 0.0
    %843 = vmatprep.subr.mxu0 0.0
    %844 = vmatpush1.msra.mxu0 0.0
    %845 = vmatprep.subr.mxu0 0.0
    %846 = vmatpush1.msra.mxu0 0.0
    %847 = vmatprep.subr.mxu0 0.0
    %848 = vmatpush1.msra.mxu0 0.0
    %849 = vmatprep.mubr.f32.mxu0 0.0
    %850 = vmatmul.mubr.f32.gmra.mrb[0].mxu0 %v435
    %v851 = vpop.f32.mrb[0].mxu0
    %v852 = vadd.f32 0.0, %v851
    %v853 = vpop.f32.mrb[0].mxu0
    %854 = vdwg.mxu0
    %v855 = vmax.f32 %v852, 1.0
    %857 = vset.pattern.permute.xlu0 0
    %858 = vperm.xlu0 %857, %v855
    %v859 = vpop.permute.xlu0 %858
    %v861 = vrcp.pop %v859
    %v862 = vmul.f32 %v782, %v861
    %v863 = vmul.f32 %v40, %v704
    %v864 = vmul.f32 %v41, %v709
    %vm865 = vcmp.gt.f32.partialorder %v863, 0.0
    %vm866 = vcmp.gt.f32.partialorder %v864, 0.0
    %v867 = vsel %vm865, 1, 0
    %v868 = vsel %vm866, 1, 0
    %869 = vset.pattern.permute.xlu0 0
    %870 = vperm.xlu0 %869, %v867
    %v871 = vpop.permute.xlu0 %870
    %872 = vset.pattern.permute.xlu0 0
    %873 = vperm.xlu0 %872, %v868
    %v874 = vpop.permute.xlu0 %873
    %vm875 = vcmp.eq.s32.totalorder %v871, 1
    %vm876 = vcmp.eq.s32.totalorder %v874, 1
    %v877 = vsel %vm875, %v711, -3e+38
    %v878 = vsel %vm876, %v712, -3e+38
    %v879 = vmax.f32 %v877, %v878
    %v880 = vrot.slane %v879, 4
    %v881 = vmax.f32 %v879, %v880
    %v882 = vrot.slane %v881, 2
    %v883 = vmax.f32 %v881, %v882
    %v884 = vrot.slane %v883, 1
    %v885 = vmax.f32 %v883, %v884
    %886 = vset.pattern.permute.xlu0 1
    %887 = vperm.xlu0 %886, %v867
    %v888 = vpop.permute.xlu0 %887
    %889 = vset.pattern.permute.xlu0 1
    %890 = vperm.xlu0 %889, %v868
    %v891 = vpop.permute.xlu0 %890
    %vm892 = vcmp.eq.s32.totalorder %v888, 1
    %vm893 = vcmp.eq.s32.totalorder %v891, 1
    %v894 = vsel %vm892, %v711, -3e+38
    %v895 = vsel %vm893, %v712, -3e+38
    %v896 = vmax.f32 %v894, %v895
    %v897 = vrot.slane %v896, 4
    %v898 = vmax.f32 %v896, %v897
    %v899 = vrot.slane %v898, 2
    %v900 = vmax.f32 %v898, %v899
    %v901 = vrot.slane %v900, 1
    %v902 = vmax.f32 %v900, %v901
    %vm903 = vcmask 1040384
    %v904 = vsel %vm903, %v885, %v902
    %905 = vmatprep.subr.mxu0 0.0
    %906 = vmatpush1.msra.mxu0 %v713
    %907 = vmatprep.subr.mxu0 0.0
    %908 = vmatpush1.msra.mxu0 %v714
    %909 = vmatprep.subr.mxu0 0.0
    %910 = vmatpush1.msra.mxu0 0.0
    %911 = vmatprep.subr.mxu0 0.0
    %912 = vmatpush1.msra.mxu0 0.0
    %913 = vmatprep.subr.mxu0 0.0
    %914 = vmatpush1.msra.mxu0 0.0
    %915 = vmatprep.subr.mxu0 0.0
    %916 = vmatpush1.msra.mxu0 0.0
    %917 = vmatprep.subr.mxu0 0.0
    %918 = vmatpush1.msra.mxu0 0.0
    %919 = vmatprep.subr.mxu0 0.0
    %920 = vmatpush1.msra.mxu0 0.0
    %921 = vmatprep.subr.mxu0 0.0
    %922 = vmatpush1.msra.mxu0 0.0
    %923 = vmatprep.subr.mxu0 0.0
    %924 = vmatpush1.msra.mxu0 0.0
    %925 = vmatprep.subr.mxu0 0.0
    %926 = vmatpush1.msra.mxu0 0.0
    %927 = vmatprep.subr.mxu0 0.0
    %928 = vmatpush1.msra.mxu0 0.0
    %929 = vmatprep.subr.mxu0 0.0
    %930 = vmatpush1.msra.mxu0 0.0
    %931 = vmatprep.subr.mxu0 0.0
    %932 = vmatpush1.msra.mxu0 0.0
    %933 = vmatprep.subr.mxu0 0.0
    %934 = vmatpush1.msra.mxu0 0.0
    %935 = vmatprep.subr.mxu0 0.0
    %936 = vmatpush1.msra.mxu0 0.0
    %937 = vmatprep.subr.mxu0 0.0
    %938 = vmatpush1.msra.mxu0 0.0
    %939 = vmatprep.subr.mxu0 0.0
    %940 = vmatpush1.msra.mxu0 0.0
    %941 = vmatprep.subr.mxu0 0.0
    %942 = vmatpush1.msra.mxu0 0.0
    %943 = vmatprep.subr.mxu0 0.0
    %944 = vmatpush1.msra.mxu0 0.0
    %945 = vmatprep.subr.mxu0 0.0
    %946 = vmatpush1.msra.mxu0 0.0
    %947 = vmatprep.subr.mxu0 0.0
    %948 = vmatpush1.msra.mxu0 0.0
    %949 = vmatprep.subr.mxu0 0.0
    %950 = vmatpush1.msra.mxu0 0.0
    %951 = vmatprep.subr.mxu0 0.0
    %952 = vmatpush1.msra.mxu0 0.0
    %953 = vmatprep.subr.mxu0 0.0
    %954 = vmatpush1.msra.mxu0 0.0
    %955 = vmatprep.subr.mxu0 0.0
    %956 = vmatpush1.msra.mxu0 0.0
    %957 = vmatprep.subr.mxu0 0.0
    %958 = vmatpush1.msra.mxu0 0.0
    %959 = vmatprep.subr.mxu0 0.0
    %960 = vmatpush1.msra.mxu0 0.0
    %961 = vmatprep.subr.mxu0 0.0
    %962 = vmatpush1.msra.mxu0 0.0
    %963 = vmatprep.subr.mxu0 0.0
    %964 = vmatpush1.msra.mxu0 0.0
    %965 = vmatprep.subr.mxu0 0.0
    %966 = vmatpush1.msra.mxu0 0.0
    %967 = vmatprep.subr.mxu0 0.0
    %968 = vmatpush1.msra.mxu0 0.0
    %969 = vmatprep.mubr.f32.mxu0 0.0
    %970 = vmatmul.mubr.f32.gmra.mrb[0].mxu0 %v144
    %v971 = vpop.f32.mrb[0].mxu0
    %v972 = vadd.f32 0.0, %v971
    %v973 = vpop.f32.mrb[0].mxu0
    %974 = vmatprep.mubr.f32.mxu0 0.0
    %975 = vmatmul.mubr.f32.gmra.mrb[0].mxu0 %v147
    %v976 = vpop.f32.mrb[0].mxu0
    %v977 = vadd.f32 0.0, %v976
    %v978 = vpop.f32.mrb[0].mxu0
    %979 = vdwg.mxu0
    %v980 = vmul.f32 %v704, %v972
    %v981 = vmul.f32 %v709, %v977
    %v982 = vld [vmem:[%s7] sm:$0xff]
    %v983 = vld [vmem:[%s7 + $0x8] sm:$0xff]
    %v984 = vld [vmem:[%s7 + $0x10] sm:$0xff]
    %v985 = vld [vmem:[%s7 + $0x18] sm:$0xff]
    %v986 = vld [vmem:[%s7 + $0x20] sm:$0xff]
    %v987 = vld [vmem:[%s7 + $0x28] sm:$0xff]
    %v988 = vld [vmem:[%s7 + $0x30] sm:$0xff]
    %v989 = vld [vmem:[%s7 + $0x38] sm:$0xff]
    %v990 = vld [vmem:[%s7 + $0x40] sm:$0xff]
    %v991 = vld [vmem:[%s7 + $0x48] sm:$0xff]
    %v992 = vld [vmem:[%s7 + $0x50] sm:$0xff]
    %v993 = vld [vmem:[%s7 + $0x58] sm:$0xff]
    %v994 = vld [vmem:[%s7 + $0x60] sm:$0xff]
    %v995 = vld [vmem:[%s7 + $0x68] sm:$0xff]
    %v996 = vld [vmem:[%s7 + $0x70] sm:$0xff]
    %v997 = vld [vmem:[%s7 + $0x78] sm:$0xff]
    %v998 = vld [vmem:[%s7 + $0x80] sm:$0xff]
    %v999 = vld [vmem:[%s7 + $0x88] sm:$0xff]
    %v1000 = vld [vmem:[%s7 + $0x90] sm:$0xff]
    %v1001 = vld [vmem:[%s7 + $0x98] sm:$0xff]
    %v1002 = vld [vmem:[%s7 + $0xa0] sm:$0xff]
    %v1003 = vld [vmem:[%s7 + $0xa8] sm:$0xff]
    %v1004 = vld [vmem:[%s7 + $0xb0] sm:$0xff]
    %v1005 = vld [vmem:[%s7 + $0xb8] sm:$0xff]
    %v1006 = vld [vmem:[%s7 + $0xc0] sm:$0xff]
    %v1007 = vld [vmem:[%s7 + $0xc8] sm:$0xff]
    %v1008 = vld [vmem:[%s7 + $0xd0] sm:$0xff]
    %v1009 = vld [vmem:[%s7 + $0xd8] sm:$0xff]
    %v1010 = vld [vmem:[%s7 + $0xe0] sm:$0xff]
    %v1011 = vld [vmem:[%s7 + $0xe8] sm:$0xff]
    %v1012 = vld [vmem:[%s7 + $0xf0] sm:$0xff]
    %v1013 = vld [vmem:[%s7 + $0xf8] sm:$0xff]
    %v1014 = vld [vmem:[%s8] sm:$0x1]
    %v1016 = vlaneseq
    %v1017 = vshrl.u32 %v1016, 7
    %v1018 = vsub.s32 0, %v1017
    %v1019 = vrot.slane %v1014, %v1018
    %1021 = vmatprep.subr.mxu0 0.0
    %1022 = vmatpush1.msra.mxu0 %v982
    %1023 = vmatprep.subr.mxu0 0.0
    %1024 = vmatpush1.msra.mxu0 %v983
    %1025 = vmatprep.subr.mxu0 0.0
    %1026 = vmatpush1.msra.mxu0 %v984
    %1027 = vmatprep.subr.mxu0 0.0
    %1028 = vmatpush1.msra.mxu0 %v985
    %1029 = vmatprep.subr.mxu0 0.0
    %1030 = vmatpush1.msra.mxu0 %v986
    %1031 = vmatprep.subr.mxu0 0.0
    %1032 = vmatpush1.msra.mxu0 %v987
    %1033 = vmatprep.subr.mxu0 0.0
    %1034 = vmatpush1.msra.mxu0 %v988
    %1035 = vmatprep.subr.mxu0 0.0
    %1036 = vmatpush1.msra.mxu0 %v989
    %1037 = vmatprep.subr.mxu0 0.0
    %1038 = vmatpush1.msra.mxu0 %v990
    %1039 = vmatprep.subr.mxu0 0.0
    %1040 = vmatpush1.msra.mxu0 %v991
    %1041 = vmatprep.subr.mxu0 0.0
    %1042 = vmatpush1.msra.mxu0 %v992
    %1043 = vmatprep.subr.mxu0 0.0
    %1044 = vmatpush1.msra.mxu0 %v993
    %1045 = vmatprep.subr.mxu0 0.0
    %1046 = vmatpush1.msra.mxu0 %v994
    %1047 = vmatprep.subr.mxu0 0.0
    %1048 = vmatpush1.msra.mxu0 %v995
    %1049 = vmatprep.subr.mxu0 0.0
    %1050 = vmatpush1.msra.mxu0 %v996
    %1051 = vmatprep.subr.mxu0 0.0
    %1052 = vmatpush1.msra.mxu0 %v997
    %1053 = vmatprep.subr.mxu0 0.0
    %1054 = vmatpush1.msra.mxu0 %v998
    %1055 = vmatprep.subr.mxu0 0.0
    %1056 = vmatpush1.msra.mxu0 %v999
    %1057 = vmatprep.subr.mxu0 0.0
    %1058 = vmatpush1.msra.mxu0 %v1000
    %1059 = vmatprep.subr.mxu0 0.0
    %1060 = vmatpush1.msra.mxu0 %v1001
    %1061 = vmatprep.subr.mxu0 0.0
    %1062 = vmatpush1.msra.mxu0 %v1002
    %1063 = vmatprep.subr.mxu0 0.0
    %1064 = vmatpush1.msra.mxu0 %v1003
    %1065 = vmatprep.subr.mxu0 0.0
    %1066 = vmatpush1.msra.mxu0 %v1004
    %1067 = vmatprep.subr.mxu0 0.0
    %1068 = vmatpush1.msra.mxu0 %v1005
    %1069 = vmatprep.subr.mxu0 0.0
    %1070 = vmatpush1.msra.mxu0 %v1006
    %1071 = vmatprep.subr.mxu0 0.0
    %1072 = vmatpush1.msra.mxu0 %v1007
    %1073 = vmatprep.subr.mxu0 0.0
    %1074 = vmatpush1.msra.mxu0 %v1008
    %1075 = vmatprep.subr.mxu0 0.0
    %1076 = vmatpush1.msra.mxu0 %v1009
    %1077 = vmatprep.subr.mxu0 0.0
    %1078 = vmatpush1.msra.mxu0 %v1010
    %1079 = vmatprep.subr.mxu0 0.0
    %1080 = vmatpush1.msra.mxu0 %v1011
    %1081 = vmatprep.subr.mxu0 0.0
    %1082 = vmatpush1.msra.mxu0 %v1012
    %1083 = vmatprep.subr.mxu0 0.0
    %1084 = vmatpush1.msra.mxu0 %v1013
    %1085 = vmatprep.mubr.f32.mxu0 %v980
    %1086 = vmatmul.mubr.f32.gmra.mrb[0].mxu0 %v711
    %v1087 = vpop.f32.mrb[0].mxu0
    %v1088 = vadd.f32 %v1019, %v1087
    %v1089 = vpop.f32.mrb[0].mxu0
    %1090 = vmatprep.mubr.f32.mxu0 %v981
    %1091 = vmatmul.mubr.f32.gmra.mrb[0].mxu0 %v712
    %v1092 = vpop.f32.mrb[0].mxu0
    %v1093 = vadd.f32 %v1019, %v1092
    %v1094 = vpop.f32.mrb[0].mxu0
    %1095 = vdwg.mxu0
    %v1096 = vmax.f32 %v1088, 0.0
    %v1097 = vmax.f32 %v1093, 0.0
    %v1098 = vld [vmem:[%s9] sm:$0xff]
    %v1099 = vld [vmem:[%s9 + $0x8] sm:$0xff]
    %v1100 = vld [vmem:[%s9 + $0x10] sm:$0xff]
    %v1101 = vld [vmem:[%s9 + $0x18] sm:$0xff]
    %v1102 = vld [vmem:[%s9 + $0x20] sm:$0xff]
    %v1103 = vld [vmem:[%s9 + $0x28] sm:$0xff]
    %v1104 = vld [vmem:[%s9 + $0x30] sm:$0xff]
    %v1105 = vld [vmem:[%s9 + $0x38] sm:$0xff]
    %v1106 = vld [vmem:[%s9 + $0x40] sm:$0xff]
    %v1107 = vld [vmem:[%s9 + $0x48] sm:$0xff]
    %v1108 = vld [vmem:[%s9 + $0x50] sm:$0xff]
    %v1109 = vld [vmem:[%s9 + $0x58] sm:$0xff]
    %v1110 = vld [vmem:[%s9 + $0x60] sm:$0xff]
    %v1111 = vld [vmem:[%s9 + $0x68] sm:$0xff]
    %v1112 = vld [vmem:[%s9 + $0x70] sm:$0xff]
    %v1113 = vld [vmem:[%s9 + $0x78] sm:$0xff]
    %1114 = vmatprep.subr.mxu0 0.0
    %1115 = vmatpush1.msra.mxu0 %v1098
    %1116 = vmatprep.subr.mxu0 0.0
    %1117 = vmatpush1.msra.mxu0 %v1099
    %1118 = vmatprep.subr.mxu0 0.0
    %1119 = vmatpush1.msra.mxu0 %v1100
    %1120 = vmatprep.subr.mxu0 0.0
    %1121 = vmatpush1.msra.mxu0 %v1101
    %1122 = vmatprep.subr.mxu0 0.0
    %1123 = vmatpush1.msra.mxu0 %v1102
    %1124 = vmatprep.subr.mxu0 0.0
    %1125 = vmatpush1.msra.mxu0 %v1103
    %1126 = vmatprep.subr.mxu0 0.0
    %1127 = vmatpush1.msra.mxu0 %v1104
    %1128 = vmatprep.subr.mxu0 0.0
    %1129 = vmatpush1.msra.mxu0 %v1105
    %1130 = vmatprep.subr.mxu0 0.0
    %1131 = vmatpush1.msra.mxu0 %v1106
    %1132 = vmatprep.subr.mxu0 0.0
    %1133 = vmatpush1.msra.mxu0 %v1107
    %1134 = vmatprep.subr.mxu0 0.0
    %1135 = vmatpush1.msra.mxu0 %v1108
    %1136 = vmatprep.subr.mxu0 0.0
    %1137 = vmatpush1.msra.mxu0 %v1109
    %1138 = vmatprep.subr.mxu0 0.0
    %1139 = vmatpush1.msra.mxu0 %v1110
    %1140 = vmatprep.subr.mxu0 0.0
    %1141 = vmatpush1.msra.mxu0 %v1111
    %1142 = vmatprep.subr.mxu0 0.0
    %1143 = vmatpush1.msra.mxu0 %v1112
    %1144 = vmatprep.subr.mxu0 0.0
    %1145 = vmatpush1.msra.mxu0 %v1113
    %1146 = vmatprep.subr.mxu0 0.0
    %1147 = vmatpush1.msra.mxu0 0.0
    %1148 = vmatprep.subr.mxu0 0.0
    %1149 = vmatpush1.msra.mxu0 0.0
    %1150 = vmatprep.subr.mxu0 0.0
    %1151 = vmatpush1.msra.mxu0 0.0
    %1152 = vmatprep.subr.mxu0 0.0
    %1153 = vmatpush1.msra.mxu0 0.0
    %1154 = vmatprep.subr.mxu0 0.0
    %1155 = vmatpush1.msra.mxu0 0.0
    %1156 = vmatprep.subr.mxu0 0.0
    %1157 = vmatpush1.msra.mxu0 0.0
    %1158 = vmatprep.subr.mxu0 0.0
    %1159 = vmatpush1.msra.mxu0 0.0
    %1160 = vmatprep.subr.mxu0 0.0
    %1161 = vmatpush1.msra.mxu0 0.0
    %1162 = vmatprep.subr.mxu0 0.0
    %1163 = vmatpush1.msra.mxu0 0.0
    %1164 = vmatprep.subr.mxu0 0.0
    %1165 = vmatpush1.msra.mxu0 0.0
    %1166 = vmatprep.subr.mxu0 0.0
    %1167 = vmatpush1.msra.mxu0 0.0
    %1168 = vmatprep.subr.mxu0 0.0
    %1169 = vmatpush1.msra.mxu0 0.0
    %1170 = vmatprep.subr.mxu0 0.0
    %1171 = vmatpush1.msra.mxu0 0.0
    %1172 = vmatprep.subr.mxu0 0.0
    %1173 = vmatpush1.msra.mxu0 0.0
    %1174 = vmatprep.subr.mxu0 0.0
    %1175 = vmatpush1.msra.mxu0 0.0
    %1176 = vmatprep.subr.mxu0 0.0
    %1177 = vmatpush1.msra.mxu0 0.0
    %1178 = vmatprep.mubr.f32.mxu0 0.0
    %1179 = vmatmul.mubr.f32.gmra.mrb[0].mxu0 %v1096
    %v1180 = vpop.f32.mrb[0].mxu0
    %v1181 = vadd.f32 0.0, %v1180
    %v1182 = vpop.f32.mrb[0].mxu0
    %1183 = vmatprep.mubr.f32.mxu0 0.0
    %1184 = vmatmul.mubr.f32.gmra.mrb[0].mxu0 %v1097
    %v1185 = vpop.f32.mrb[0].mxu0
    %v1186 = vadd.f32 0.0, %v1185
    %v1187 = vpop.f32.mrb[0].mxu0
    %1188 = vdwg.mxu0
    %v1189 = vtanh.pop %v1181
    %v1190 = vtanh.pop %v1186
    %v1191 = vmul.f32 %v852, 0.8
    %v1192 = vceil.f32 %v1191
    %v1194 = vsel %vm56, %v1192, 0
    %1196 = vmatprep.subr.mxu0 0.0
    %1197 = vmatpush1.msra.mxu0 %v1194
    %1198 = vmatprep.subr.mxu0 0.0
    %1199 = vmatpush1.msra.mxu0 0.0
    %1200 = vmatprep.subr.mxu0 0.0
    %1201 = vmatpush1.msra.mxu0 0.0
    %1202 = vmatprep.subr.mxu0 0.0
    %1203 = vmatpush1.msra.mxu0 0.0
    %1204 = vmatprep.subr.mxu0 0.0
    %1205 = vmatpush1.msra.mxu0 0.0
    %1206 = vmatprep.subr.mxu0 0.0
    %1207 = vmatpush1.msra.mxu0 0.0
    %1208 = vmatprep.subr.mxu0 0.0
    %1209 = vmatpush1.msra.mxu0 0.0
    %1210 = vmatprep.subr.mxu0 0.0
    %1211 = vmatpush1.msra.mxu0 0.0
    %1212 = vmatprep.subr.mxu0 0.0
    %1213 = vmatpush1.msra.mxu0 0.0
    %1214 = vmatprep.subr.mxu0 0.0
    %1215 = vmatpush1.msra.mxu0 0.0
    %1216 = vmatprep.subr.mxu0 0.0
    %1217 = vmatpush1.msra.mxu0 0.0
    %1218 = vmatprep.subr.mxu0 0.0
    %1219 = vmatpush1.msra.mxu0 0.0
    %1220 = vmatprep.subr.mxu0 0.0
    %1221 = vmatpush1.msra.mxu0 0.0
    %1222 = vmatprep.subr.mxu0 0.0
    %1223 = vmatpush1.msra.mxu0 0.0
    %1224 = vmatprep.subr.mxu0 0.0
    %1225 = vmatpush1.msra.mxu0 0.0
    %1226 = vmatprep.subr.mxu0 0.0
    %1227 = vmatpush1.msra.mxu0 0.0
    %1228 = vmatprep.subr.mxu0 0.0
    %1229 = vmatpush1.msra.mxu0 0.0
    %1230 = vmatprep.subr.mxu0 0.0
    %1231 = vmatpush1.msra.mxu0 0.0
    %1232 = vmatprep.subr.mxu0 0.0
    %1233 = vmatpush1.msra.mxu0 0.0
    %1234 = vmatprep.subr.mxu0 0.0
    %1235 = vmatpush1.msra.mxu0 0.0
    %1236 = vmatprep.subr.mxu0 0.0
    %1237 = vmatpush1.msra.mxu0 0.0
    %1238 = vmatprep.subr.mxu0 0.0
    %1239 = vmatpush1.msra.mxu0 0.0
    %1240 = vmatprep.subr.mxu0 0.0
    %1241 = vmatpush1.msra.mxu0 0.0
    %1242 = vmatprep.subr.mxu0 0.0
    %1243 = vmatpush1.msra.mxu0 0.0
    %1244 = vmatprep.subr.mxu0 0.0
    %1245 = vmatpush1.msra.mxu0 0.0
    %1246 = vmatprep.subr.mxu0 0.0
    %1247 = vmatpush1.msra.mxu0 0.0
    %1248 = vmatprep.subr.mxu0 0.0
    %1249 = vmatpush1.msra.mxu0 0.0
    %1250 = vmatprep.subr.mxu0 0.0
    %1251 = vmatpush1.msra.mxu0 0.0
    %1252 = vmatprep.subr.mxu0 0.0
    %1253 = vmatpush1.msra.mxu0 0.0
    %1254 = vmatprep.subr.mxu0 0.0
    %1255 = vmatpush1.msra.mxu0 0.0
    %1256 = vmatprep.subr.mxu0 0.0
    %1257 = vmatpush1.msra.mxu0 0.0
    %1258 = vmatprep.subr.mxu0 0.0
    %1259 = vmatpush1.msra.mxu0 0.0
    %1260 = vmatprep.mubr.f32.mxu0 0.0
    %1261 = vmatmul.mubr.f32.gmra.mrb[0].mxu0 %v51
    %v1262 = vpop.f32.mrb[0].mxu0
    %v1263 = vadd.f32 0.0, %v1262
    %v1264 = vpop.f32.mrb[0].mxu0
    %1265 = vmatprep.mubr.f32.mxu0 0.0
    %1266 = vmatmul.mubr.f32.gmra.mrb[0].mxu0 %v54
    %v1267 = vpop.f32.mrb[0].mxu0
    %v1268 = vadd.f32 0.0, %v1267
    %v1269 = vpop.f32.mrb[0].mxu0
    %1270 = vdwg.mxu0
    %1271 = vxpose.xlu0.b32.start [1/16] %v1189, 128
    %1272 = vxpose.xlu0.b32.cont [2/16] %v1190, 128
    %1273 = vxpose.xlu0.b32.cont [3/16] 0.0, 128
    %1274 = vxpose.xlu0.b32.cont [4/16] 0.0, 128
    %1275 = vxpose.xlu0.b32.cont [5/16] 0.0, 128
    %1276 = vxpose.xlu0.b32.cont [6/16] 0.0, 128
    %1277 = vxpose.xlu0.b32.cont [7/16] 0.0, 128
    %1278 = vxpose.xlu0.b32.cont [8/16] 0.0, 128
    %1279 = vxpose.xlu0.b32.cont [9/16] 0.0, 128
    %1280 = vxpose.xlu0.b32.cont [10/16] 0.0, 128
    %1281 = vxpose.xlu0.b32.cont [11/16] 0.0, 128
    %1282 = vxpose.xlu0.b32.cont [12/16] 0.0, 128
    %1283 = vxpose.xlu0.b32.cont [13/16] 0.0, 128
    %1284 = vxpose.xlu0.b32.cont [14/16] 0.0, 128
    %1285 = vxpose.xlu0.b32.cont [15/16] 0.0, 128
    %1286 = vxpose.xlu0.b32.end [16/16] 0.0, 128
    %v1287 = vpop.trf.xlu0
    %v1288 = vpop.trf.xlu0
    %v1289 = vpop.trf.xlu0
    %v1290 = vpop.trf.xlu0
    %v1291 = vpop.trf.xlu0
    %v1292 = vpop.trf.xlu0
    %v1293 = vpop.trf.xlu0
    %v1294 = vpop.trf.xlu0
    %v1295 = vpop.trf.xlu0
    %v1296 = vpop.trf.xlu0
    %v1297 = vpop.trf.xlu0
    %v1298 = vpop.trf.xlu0
    %v1299 = vpop.trf.xlu0
    %v1300 = vpop.trf.xlu0
    %v1301 = vpop.trf.xlu0
    %v1302 = vpop.trf.xlu0
    %v1303 = vlaneseq
    %v1304 = vshrl.u32 %v1303, 7
    %v1305 = vsub.s32 0, %v1304
    %v1306 = vrot.slane %v1287, %v1305
    %1308 = vset.pattern.permute.xlu0 0
    %1309 = vperm.xlu0 %1308, %v1189
    %v1310 = vpop.permute.xlu0 %1309
    %1313 = vset.pattern.permute.xlu0 0
    %1314 = vperm.xlu0 %1313, %v1190
    %v1315 = vpop.permute.xlu0 %1314
    %vm1317 = vcmp.gt.f32.partialorder %v1306, %v1310
    %vm1318 = vcmp.gt.f32.partialorder %v1306, %v1315
    %vm1319 = vcmp.eq.f32.partialorder %v1306, %v1310
    %vm1320 = vcmp.eq.f32.partialorder %v1306, %v1315
    %vm1321 = vmand %vm1319, %vm637
    %vm1322 = vmand %vm1320, %vm638
    %vm1323 = vmor %vm1317, %vm1321
    %vm1324 = vmor %vm1318, %vm1322
    %v1325 = vsel %vm1323, 1.0, 0.0
    %v1326 = vsel %vm1324, 1.0, 0.0
    %1327 = vxpose.xlu0.b32.start [1/16] %v697, 128
    %1328 = vxpose.xlu0.b32.cont [2/16] %v698, 128
    %1329 = vxpose.xlu0.b32.cont [3/16] 0.0, 128
    %1330 = vxpose.xlu0.b32.cont [4/16] 0.0, 128
    %1331 = vxpose.xlu0.b32.cont [5/16] 0.0, 128
    %1332 = vxpose.xlu0.b32.cont [6/16] 0.0, 128
    %1333 = vxpose.xlu0.b32.cont [7/16] 0.0, 128
    %1334 = vxpose.xlu0.b32.cont [8/16] 0.0, 128
    %1335 = vxpose.xlu0.b32.cont [9/16] 0.0, 128
    %1336 = vxpose.xlu0.b32.cont [10/16] 0.0, 128
    %1337 = vxpose.xlu0.b32.cont [11/16] 0.0, 128
    %1338 = vxpose.xlu0.b32.cont [12/16] 0.0, 128
    %1339 = vxpose.xlu0.b32.cont [13/16] 0.0, 128
    %1340 = vxpose.xlu0.b32.cont [14/16] 0.0, 128
    %1341 = vxpose.xlu0.b32.cont [15/16] 0.0, 128
    %1342 = vxpose.xlu0.b32.end [16/16] 0.0, 128
    %v1343 = vpop.trf.xlu0
    %v1344 = vpop.trf.xlu0
    %v1345 = vpop.trf.xlu0
    %v1346 = vpop.trf.xlu0
    %v1347 = vpop.trf.xlu0
    %v1348 = vpop.trf.xlu0
    %v1349 = vpop.trf.xlu0
    %v1350 = vpop.trf.xlu0
    %v1351 = vpop.trf.xlu0
    %v1352 = vpop.trf.xlu0
    %v1353 = vpop.trf.xlu0
    %v1354 = vpop.trf.xlu0
    %v1355 = vpop.trf.xlu0
    %v1356 = vpop.trf.xlu0
    %v1357 = vpop.trf.xlu0
    %v1358 = vpop.trf.xlu0
    %v1359 = vlaneseq
    %v1360 = vshrl.u32 %v1359, 7
    %v1361 = vsub.s32 0, %v1360
    %v1362 = vrot.slane %v1343, %v1361
    %v1363 = vmul.f32 %v127, %v1362
    %v1364 = vmul.f32 %v132, %v1362
    %v1365 = vmul.f32 %v1363, %v1325
    %v1366 = vmul.f32 %v1364, %v1326
    %v1367 = vsel %vm142, %v1365, 0.0
    %1368 = vadd.xlane.f32.xlu0 %v1367
    %v1369 = vpop.xlane.xlu0 %1368
    %v1370 = vsel %vm142, %v1366, 0.0
    %1371 = vadd.xlane.f32.xlu0 %v1370
    %v1372 = vpop.xlane.xlu0 %1371
    %vm1373 = vcmp.lt.f32.partialorder %v1369, %v1263
    %vm1374 = vcmp.lt.f32.partialorder %v1372, %v1268
    %vm1375 = vcmp.gt.f32.partialorder %v697, 0.0
    %vm1376 = vcmp.gt.f32.partialorder %v698, 0.0
    %vm1377 = vmand %vm1373, %vm1375
    %vm1378 = vmand %vm1374, %vm1376
    %v1379 = vsel %vm1377, 1.0, 0.0
    %v1380 = vsel %vm1378, 1.0, 0.0
    %v1381 = vmul.f32 %v1096, %v1310
    %v1382 = vmul.f32 %v1097, %v1315
    %1384 = vset.pattern.permute.xlu0 0
    %1385 = vperm.xlu0 %1384, %v1379
    %v1386 = vpop.permute.xlu0 %1385
    %1389 = vset.pattern.permute.xlu0 0
    %1390 = vperm.xlu0 %1389, %v1380
    %v1391 = vpop.permute.xlu0 %1390
    %v1393 = vmul.f32 %v1381, %v1386
    %v1394 = vmul.f32 %v1382, %v1391
    %v1395 = vmul.f32 %v1393, %v1386
    %v1396 = vmul.f32 %v1394, %v1391
    %1397 = vmatprep.subr.mxu0 0.0
    %1398 = vmatpush1.msra.mxu0 %v1395
    %1399 = vmatprep.subr.mxu0 0.0
    %1400 = vmatpush1.msra.mxu0 %v1396
    %1401 = vmatprep.subr.mxu0 0.0
    %1402 = vmatpush1.msra.mxu0 0.0
    %1403 = vmatprep.subr.mxu0 0.0
    %1404 = vmatpush1.msra.mxu0 0.0
    %1405 = vmatprep.subr.mxu0 0.0
    %1406 = vmatpush1.msra.mxu0 0.0
    %1407 = vmatprep.subr.mxu0 0.0
    %1408 = vmatpush1.msra.mxu0 0.0
    %1409 = vmatprep.subr.mxu0 0.0
    %1410 = vmatpush1.msra.mxu0 0.0
    %1411 = vmatprep.subr.mxu0 0.0
    %1412 = vmatpush1.msra.mxu0 0.0
    %1413 = vmatprep.subr.mxu0 0.0
    %1414 = vmatpush1.msra.mxu0 0.0
    %1415 = vmatprep.subr.mxu0 0.0
    %1416 = vmatpush1.msra.mxu0 0.0
    %1417 = vmatprep.subr.mxu0 0.0
    %1418 = vmatpush1.msra.mxu0 0.0
    %1419 = vmatprep.subr.mxu0 0.0
    %1420 = vmatpush1.msra.mxu0 0.0
    %1421 = vmatprep.subr.mxu0 0.0
    %1422 = vmatpush1.msra.mxu0 0.0
    %1423 = vmatprep.subr.mxu0 0.0
    %1424 = vmatpush1.msra.mxu0 0.0
    %1425 = vmatprep.subr.mxu0 0.0
    %1426 = vmatpush1.msra.mxu0 0.0
    %1427 = vmatprep.subr.mxu0 0.0
    %1428 = vmatpush1.msra.mxu0 0.0
    %1429 = vmatprep.subr.mxu0 0.0
    %1430 = vmatpush1.msra.mxu0 0.0
    %1431 = vmatprep.subr.mxu0 0.0
    %1432 = vmatpush1.msra.mxu0 0.0
    %1433 = vmatprep.subr.mxu0 0.0
    %1434 = vmatpush1.msra.mxu0 0.0
    %1435 = vmatprep.subr.mxu0 0.0
    %1436 = vmatpush1.msra.mxu0 0.0
    %1437 = vmatprep.subr.mxu0 0.0
    %1438 = vmatpush1.msra.mxu0 0.0
    %1439 = vmatprep.subr.mxu0 0.0
    %1440 = vmatpush1.msra.mxu0 0.0
    %1441 = vmatprep.subr.mxu0 0.0
    %1442 = vmatpush1.msra.mxu0 0.0
    %1443 = vmatprep.subr.mxu0 0.0
    %1444 = vmatpush1.msra.mxu0 0.0
    %1445 = vmatprep.subr.mxu0 0.0
    %1446 = vmatpush1.msra.mxu0 0.0
    %1447 = vmatprep.subr.mxu0 0.0
    %1448 = vmatpush1.msra.mxu0 0.0
    %1449 = vmatprep.subr.mxu0 0.0
    %1450 = vmatpush1.msra.mxu0 0.0
    %1451 = vmatprep.subr.mxu0 0.0
    %1452 = vmatpush1.msra.mxu0 0.0
    %1453 = vmatprep.subr.mxu0 0.0
    %1454 = vmatpush1.msra.mxu0 0.0
    %1455 = vmatprep.subr.mxu0 0.0
    %1456 = vmatpush1.msra.mxu0 0.0
    %1457 = vmatprep.subr.mxu0 0.0
    %1458 = vmatpush1.msra.mxu0 0.0
    %1459 = vmatprep.subr.mxu0 0.0
    %1460 = vmatpush1.msra.mxu0 0.0
    %1461 = vmatprep.mubr.f32.mxu0 0.0
    %1462 = vmatmul.mubr.f32.gmra.mrb[0].mxu0 %v435
    %v1463 = vpop.f32.mrb[0].mxu0
    %v1464 = vadd.f32 0.0, %v1463
    %v1465 = vpop.f32.mrb[0].mxu0
    %1466 = vdwg.mxu0
    %1467 = vmatprep.subr.mxu0 0.0
    %1468 = vmatpush1.msra.mxu0 %v1379
    %1469 = vmatprep.subr.mxu0 0.0
    %1470 = vmatpush1.msra.mxu0 %v1380
    %1471 = vmatprep.subr.mxu0 0.0
    %1472 = vmatpush1.msra.mxu0 0.0
    %1473 = vmatprep.subr.mxu0 0.0
    %1474 = vmatpush1.msra.mxu0 0.0
    %1475 = vmatprep.subr.mxu0 0.0
    %1476 = vmatpush1.msra.mxu0 0.0
    %1477 = vmatprep.subr.mxu0 0.0
    %1478 = vmatpush1.msra.mxu0 0.0
    %1479 = vmatprep.subr.mxu0 0.0
    %1480 = vmatpush1.msra.mxu0 0.0
    %1481 = vmatprep.subr.mxu0 0.0
    %1482 = vmatpush1.msra.mxu0 0.0
    %1483 = vmatprep.subr.mxu0 0.0
    %1484 = vmatpush1.msra.mxu0 0.0
    %1485 = vmatprep.subr.mxu0 0.0
    %1486 = vmatpush1.msra.mxu0 0.0
    %1487 = vmatprep.subr.mxu0 0.0
    %1488 = vmatpush1.msra.mxu0 0.0
    %1489 = vmatprep.subr.mxu0 0.0
    %1490 = vmatpush1.msra.mxu0 0.0
    %1491 = vmatprep.subr.mxu0 0.0
    %1492 = vmatpush1.msra.mxu0 0.0
    %1493 = vmatprep.subr.mxu0 0.0
    %1494 = vmatpush1.msra.mxu0 0.0
    %1495 = vmatprep.subr.mxu0 0.0
    %1496 = vmatpush1.msra.mxu0 0.0
    %1497 = vmatprep.subr.mxu0 0.0
    %1498 = vmatpush1.msra.mxu0 0.0
    %1499 = vmatprep.subr.mxu0 0.0
    %1500 = vmatpush1.msra.mxu0 0.0
    %1501 = vmatprep.subr.mxu0 0.0
    %1502 = vmatpush1.msra.mxu0 0.0
    %1503 = vmatprep.subr.mxu0 0.0
    %1504 = vmatpush1.msra.mxu0 0.0
    %1505 = vmatprep.subr.mxu0 0.0
    %1506 = vmatpush1.msra.mxu0 0.0
    %1507 = vmatprep.subr.mxu0 0.0
    %1508 = vmatpush1.msra.mxu0 0.0
    %1509 = vmatprep.subr.mxu0 0.0
    %1510 = vmatpush1.msra.mxu0 0.0
    %1511 = vmatprep.subr.mxu0 0.0
    %1512 = vmatpush1.msra.mxu0 0.0
    %1513 = vmatprep.subr.mxu0 0.0
    %1514 = vmatpush1.msra.mxu0 0.0
    %1515 = vmatprep.subr.mxu0 0.0
    %1516 = vmatpush1.msra.mxu0 0.0
    %1517 = vmatprep.subr.mxu0 0.0
    %1518 = vmatpush1.msra.mxu0 0.0
    %1519 = vmatprep.subr.mxu0 0.0
    %1520 = vmatpush1.msra.mxu0 0.0
    %1521 = vmatprep.subr.mxu0 0.0
    %1522 = vmatpush1.msra.mxu0 0.0
    %1523 = vmatprep.subr.mxu0 0.0
    %1524 = vmatpush1.msra.mxu0 0.0
    %1525 = vmatprep.subr.mxu0 0.0
    %1526 = vmatpush1.msra.mxu0 0.0
    %1527 = vmatprep.subr.mxu0 0.0
    %1528 = vmatpush1.msra.mxu0 0.0
    %1529 = vmatprep.subr.mxu0 0.0
    %1530 = vmatpush1.msra.mxu0 0.0
    %1531 = vmatprep.mubr.f32.mxu0 0.0
    %1532 = vmatmul.mubr.f32.gmra.mrb[0].mxu0 %v435
    %v1533 = vpop.f32.mrb[0].mxu0
    %v1534 = vadd.f32 0.0, %v1533
    %v1535 = vpop.f32.mrb[0].mxu0
    %1536 = vdwg.mxu0
    %v1537 = vmax.f32 %v1534, 1.0
    %1539 = vset.pattern.permute.xlu0 0
    %1540 = vperm.xlu0 %1539, %v1537
    %v1541 = vpop.permute.xlu0 %1540
    %v1543 = vrcp.pop %v1541
    %v1544 = vmul.f32 %v1464, %v1543
    %v1545 = vmul.f32 %v40, %v1386
    %v1546 = vmul.f32 %v41, %v1391
    %vm1547 = vcmp.gt.f32.partialorder %v1545, 0.0
    %vm1548 = vcmp.gt.f32.partialorder %v1546, 0.0
    %v1549 = vsel %vm1547, 1, 0
    %v1550 = vsel %vm1548, 1, 0
    %1551 = vset.pattern.permute.xlu0 0
    %1552 = vperm.xlu0 %1551, %v1549
    %v1553 = vpop.permute.xlu0 %1552
    %1554 = vset.pattern.permute.xlu0 0
    %1555 = vperm.xlu0 %1554, %v1550
    %v1556 = vpop.permute.xlu0 %1555
    %vm1557 = vcmp.eq.s32.totalorder %v1553, 1
    %vm1558 = vcmp.eq.s32.totalorder %v1556, 1
    %v1559 = vsel %vm1557, %v1393, -3e+38
    %v1560 = vsel %vm1558, %v1394, -3e+38
    %v1561 = vmax.f32 %v1559, %v1560
    %v1562 = vrot.slane %v1561, 4
    %v1563 = vmax.f32 %v1561, %v1562
    %v1564 = vrot.slane %v1563, 2
    %v1565 = vmax.f32 %v1563, %v1564
    %v1566 = vrot.slane %v1565, 1
    %v1567 = vmax.f32 %v1565, %v1566
    %1568 = vset.pattern.permute.xlu0 1
    %1569 = vperm.xlu0 %1568, %v1549
    %v1570 = vpop.permute.xlu0 %1569
    %1571 = vset.pattern.permute.xlu0 1
    %1572 = vperm.xlu0 %1571, %v1550
    %v1573 = vpop.permute.xlu0 %1572
    %vm1574 = vcmp.eq.s32.totalorder %v1570, 1
    %vm1575 = vcmp.eq.s32.totalorder %v1573, 1
    %v1576 = vsel %vm1574, %v1393, -3e+38
    %v1577 = vsel %vm1575, %v1394, -3e+38
    %v1578 = vmax.f32 %v1576, %v1577
    %v1579 = vrot.slane %v1578, 4
    %v1580 = vmax.f32 %v1578, %v1579
    %v1581 = vrot.slane %v1580, 2
    %v1582 = vmax.f32 %v1580, %v1581
    %v1583 = vrot.slane %v1582, 1
    %v1584 = vmax.f32 %v1582, %v1583
    %v1585 = vsel %vm903, %v1567, %v1584
    %v1586 = vadd.f32 %v862, %v1544
    %1587 = vst [vmem:[#allocation2] sm:$0x3] %v1586
    %v1588 = vadd.f32 %v904, %v1585
    %1589 = vst [vmem:[#allocation2 + $0x2] sm:$0x3] %v1588
    // Predicated region
    $region42: #{feature_extractor.1} parent=1 // pred_check
      _
    $region43: #{feature_extractor.1} parent=1 // pred_check_branch
      %1591 = sbr.rel (0) target = $region45
    $region44: #{feature_extractor.1} parent=1 // pred_region
      %s1593 = ssub.s32 64, 64
      %1594 = vsyncadd [#allocation3], %s1593
      %s1596 = sshll.u32 [#allocation2], 4
      %s1597 = int_to_ptr.vmem [resolvable:$true] %s1596
      %1599 = dma.vmem_to_hbm [thread:$0]  %s1597, 64, %s10, [#allocation3]
    $region45: #{feature_extractor.1} parent=1 // pred_fallthru
      _
    // Predicated region
    $region46: #{feature_extractor.1} parent=1 // pred_check
      _
    $region47: #{feature_extractor.1} parent=1 // pred_check_branch
      %1601 = sbr.rel (0) target = $region49
    $region48: #{feature_extractor.1} parent=1 // pred_region
      %1602 = dma.done [#allocation3], 64
    $region49: #{feature_extractor.1} parent=1 // pred_fallthru
      _
    %1603 = vsyncpa [#allocation3], 1

</llo_original>
